<compile_context>
chip_gen: v6e
topology: v6e:2x2x1
jax: 0.10.0
libtpu: 0.0.40
codegen_flags: <defaults>
</compile_context>

<pallas_src>
import functools
from itertools import product
from math import sqrt

import numpy as np
import jax
import jax.numpy as jnp
from jax import lax
from jax.experimental import pallas as pl
from jax.experimental.pallas import tpu as pltpu

# 48 MiB scoped-VMEM ceiling: generous on v5e/v6e (128 MiB physical) while leaving
# double-buffering headroom on v7x (64 MiB physical per TensorCore).
VMEM_LIMIT_BYTES = 48 * 1024 * 1024
STRIP_BYTES_CAP = 4 * 1024 * 1024      # target bf16 strip bytes per row block
STRIP_ROWS_MAX = 8192                  # hard cap on rows per block
TK_MAX = 2304                          # K above this is tiled in matmul_bias
_HEAD_STRIP_MIN_FMAP = 16              # heads on maps >= this use the strip kernel


def _round_up(x, m):
    return (x + m - 1) // m * m


def _cdiv(a, b):
    return (a + b - 1) // b


# ---------------------------------------------------------------------------
# Pallas kernels
# ---------------------------------------------------------------------------

def _conv_same_kernel(x_hbm, w_ref, b_ref, o_ref, a_buf, sem,
                      *, tap_offsets, relu, tm):
    """Implicit-GEMM 'same' conv.  x_hbm is the flat padded bf16 activation in HBM
    (memory_space=pl.ANY); the kernel DMAs its own overlapping (TM+OV, Cin) strip into
    VMEM scratch once per row block.  w_ref = (K*K, Cin, TN) bf16 taps, o_ref =
    (TM, TN).  The 9 tap matmuls accumulate in f32 values and write o_ref once."""
    i = pl.program_id(0)
    j = pl.program_id(1)

    # j is the inner, sequential ("arbitrary") axis -> j == 0 runs first for each i,
    # so the strip lands in scratch before any of the Cout tiles are computed.
    @pl.when(j == 0)
    def _():
        row0 = pl.multiple_of(i * tm, 16)
        cp = pltpu.make_async_copy(x_hbm.at[pl.ds(row0, a_buf.shape[0])], a_buf, sem)
        cp.start()
        cp.wait()

    acc = None
    for t, off in enumerate(tap_offsets):
        part = jnp.dot(a_buf[off:off + tm, :], w_ref[t],
                       preferred_element_type=jnp.float32)
        acc = part if acc is None else acc + part
    out = acc + b_ref[...]
    if relu:
        out = jnp.maximum(out, 0.0)
    o_ref[...] = out.astype(o_ref.dtype)


def conv2d_same(x_nhwc, w_taps, b2, *, k, dil, relu, out_dtype):
    """Stride-1, odd-K, 'same' (pad = dil*(k-1)/2) convolution via the strip kernel.

    x_nhwc : (N, H, W, Cin)                       (any float dtype)
    w_taps : (K*K, Cin, Cout) bf16                (tap order: di-major, dj-minor)
    b2     : (1, Cout) f32
    """
    N, H, W, C = x_nhwc.shape
    KK, _, Cout = w_taps.shape
    pad = dil * (k - 1) // 2
    Hp, Wp = H + 2 * pad, W + 2 * pad
    M = N * Hp * Wp                      # one output row per padded-grid position
    FRONT = pad * (Wp + 1)
    OV = 2 * FRONT                       # max tap offset

    # Row-block (TM) selection: ~STRIP_BYTES_CAP bf16 strips, TM % 16 == 0, and enough
    # grid steps for megacore sharding / pipeline overlap on the bigger layers.
    cap = max(256, min(STRIP_ROWS_MAX, STRIP_BYTES_CAP // (2 * max(C, 1)) - OV))
    nblk = _cdiv(M, cap)
    TN = 256 if Cout % 256 == 0 else (128 if Cout % 128 == 0 else Cout)
    nbn = _cdiv(Cout, TN)
    if M >= 2048:
        nblk = max(nblk, _cdiv(4, nbn))   # at least 4 grid steps when there is work
    elif M >= 1024:
        nblk = max(nblk, 2)
    TM = _round_up(_cdiv(M, nblk), 16)
    nblk = _cdiv(M, TM)

    # One flat padded bf16 buffer: spatial zero border, FRONT halo rows in front and
    # enough zero rows at the back so every block's (TM+OV)-row window is in range.
    back = nblk * TM + FRONT - M
    xp = jnp.pad(x_nhwc.astype(jnp.bfloat16),
                 ((0, 0), (pad, pad), (pad, pad), (0, 0)))
    xe = jnp.pad(xp.reshape(M, C), ((FRONT, back), (0, 0)))
    assert nblk * TM + OV <= xe.shape[0]

    tap_offsets = tuple(di * dil * Wp + dj * dil
                        for di in range(k) for dj in range(k))

    out_flat = pl.pallas_call(
        functools.partial(_conv_same_kernel, tap_offsets=tap_offsets,
                          relu=relu, tm=TM),
        out_shape=jax.ShapeDtypeStruct((M, Cout), out_dtype),
        grid_spec=pltpu.PrefetchScalarGridSpec(
            num_scalar_prefetch=0,
            grid=(nblk, nbn),
            in_specs=[
                pl.BlockSpec(memory_space=pl.ANY),               # flat activation, HBM
                pl.BlockSpec((KK, C, TN), lambda i, j: (0, 0, j)),
                pl.BlockSpec((1, TN), lambda i, j: (0, j)),
            ],
            out_specs=pl.BlockSpec((TM, TN), lambda i, j: (i, j)),
            scratch_shapes=[pltpu.VMEM((TM + OV, C), jnp.bfloat16),
                            pltpu.SemaphoreType.DMA(())],
        ),
        compiler_params=pltpu.CompilerParams(
            dimension_semantics=("parallel", "arbitrary"),
            vmem_limit_bytes=VMEM_LIMIT_BYTES),
    )(xe, w_taps, b2)

    # Valid conv outputs are the padded-grid "center" positions.
    return out_flat.reshape(N, Hp, Wp, Cout)[:, pad:pad + H, pad:pad + W, :]


def _mm_bias_kernel(a_ref, w_ref, b_ref, o_ref, *, relu):
    out = jnp.dot(a_ref[...], w_ref[...],
                  preferred_element_type=jnp.float32) + b_ref[...]
    if relu:
        out = jnp.maximum(out, 0.0)
    o_ref[...] = out.astype(o_ref.dtype)


def _mm_bias_acc_kernel(a_ref, w_ref, b_ref, o_ref, acc_ref, *, relu):
    kk = pl.program_id(2)
    part = jnp.dot(a_ref[...], w_ref[...], preferred_element_type=jnp.float32)

    @pl.when(kk == 0)
    def _():
        acc_ref[...] = part

    @pl.when(kk > 0)
    def _():
        acc_ref[...] += part

    @pl.when(kk == pl.num_programs(2) - 1)
    def _():
        out = acc_ref[...] + b_ref[...]
        if relu:
            out = jnp.maximum(out, 0.0)
        o_ref[...] = out.astype(o_ref.dtype)


def matmul_bias(a_bf16, w_bf16, b2, *, relu=False, out_dtype=jnp.float32):
    """a: (M, K) bf16, w: (K, N) bf16, b2: (1, N) f32 -> (M, N); fused bias(+ReLU).
    M/N edge blocks are partial Pallas blocks (no host-side pad/slice); only the
    reduction axis K is tiled/zero-padded when it exceeds TK_MAX."""
    M, K = a_bf16.shape
    _, N = w_bf16.shape
    TM = M if M <= 512 else 512
    TN = 256 if N % 256 == 0 else (128 if N % 128 == 0 else N)

    if K <= TK_MAX:
        return pl.pallas_call(
            functools.partial(_mm_bias_kernel, relu=relu),
            out_shape=jax.ShapeDtypeStruct((M, N), out_dtype),
            grid_spec=pltpu.PrefetchScalarGridSpec(
                num_scalar_prefetch=0,
                grid=(_cdiv(M, TM), _cdiv(N, TN)),
                in_specs=[pl.BlockSpec((TM, K), lambda i, j: (i, 0)),
                          pl.BlockSpec((K, TN), lambda i, j: (0, j)),
                          pl.BlockSpec((1, TN), lambda i, j: (0, j))],
                out_specs=pl.BlockSpec((TM, TN), lambda i, j: (i, j)),
            ),
            compiler_params=pltpu.CompilerParams(
                dimension_semantics=("parallel", "parallel"),
                vmem_limit_bytes=VMEM_LIMIT_BYTES),
        )(a_bf16, w_bf16, b2)

    # K-tiled path (reduction axis zero-padded to a TK multiple for correctness).
    nk = _cdiv(K, TK_MAX)
    TK = _round_up(_cdiv(K, nk), 256)
    Kp = nk * TK
    if Kp != K:
        a_bf16 = jnp.pad(a_bf16, ((0, 0), (0, Kp - K)))
        w_bf16 = jnp.pad(w_bf16, ((0, Kp - K), (0, 0)))
    return pl.pallas_call(
        functools.partial(_mm_bias_acc_kernel, relu=relu),
        out_shape=jax.ShapeDtypeStruct((M, N), out_dtype),
        grid_spec=pltpu.PrefetchScalarGridSpec(
            num_scalar_prefetch=0,
            grid=(_cdiv(M, TM), _cdiv(N, TN), nk),
            in_specs=[pl.BlockSpec((TM, TK), lambda i, j, kk: (i, kk)),
                      pl.BlockSpec((TK, TN), lambda i, j, kk: (kk, j)),
                      pl.BlockSpec((1, TN), lambda i, j, kk: (0, j))],
            out_specs=pl.BlockSpec((TM, TN), lambda i, j, kk: (i, j)),
            scratch_shapes=[pltpu.VMEM((TM, TN), jnp.float32)],
        ),
        compiler_params=pltpu.CompilerParams(
            dimension_semantics=("parallel", "parallel", "arbitrary"),
            vmem_limit_bytes=VMEM_LIMIT_BYTES),
    )(a_bf16, w_bf16, b2)


def _l2norm_kernel(x_ref, w_ref, o_ref, *, eps):
    x = x_ref[...].astype(jnp.float32)
    ss = jnp.sum(x * x, axis=-1, keepdims=True)
    inv = lax.rsqrt(ss + eps * eps)      # one EUP op; eps^2 keeps all-zero rows finite
    o_ref[...] = (x * inv * w_ref[...]).astype(o_ref.dtype)


def l2norm(x_nhwc, weight, eps=1e-10, out_dtype=jnp.bfloat16):
    """L2Norm across channels then per-channel scale (PyTorch L2Norm semantics)."""
    N, H, W, C = x_nhwc.shape
    M = N * H * W
    x2 = x_nhwc.reshape(M, C)
    w2 = weight.reshape(1, C)
    nblk = _cdiv(M, 2048)
    TMR = M if nblk == 1 else _round_up(_cdiv(M, nblk), 16)
    out = pl.pallas_call(
        functools.partial(_l2norm_kernel, eps=eps),
        out_shape=jax.ShapeDtypeStruct((M, C), out_dtype),
        grid_spec=pltpu.PrefetchScalarGridSpec(
            num_scalar_prefetch=0,
            grid=(_cdiv(M, TMR),),
            in_specs=[pl.BlockSpec((TMR, C), lambda i: (i, 0)),
                      pl.BlockSpec((1, C), lambda i: (0, 0))],
            out_specs=pl.BlockSpec((TMR, C), lambda i: (i, 0)),
        ),
        compiler_params=pltpu.CompilerParams(
            dimension_semantics=("parallel",),
            vmem_limit_bytes=VMEM_LIMIT_BYTES),
    )(x2, w2)
    return out.reshape(N, H, W, C)


# ---------------------------------------------------------------------------
# Conv wrappers for the remaining (small / strided / dilated) cases
# ---------------------------------------------------------------------------

def conv2d_1x1(x_nhwc, w_mat, b2, *, relu=False, out_dtype=jnp.float32):
    N, H, W, Cin = x_nhwc.shape
    a = x_nhwc.reshape(N * H * W, Cin).astype(jnp.bfloat16)
    out = matmul_bias(a, w_mat, b2, relu=relu, out_dtype=out_dtype)
    return out.reshape(N, H, W, w_mat.shape[1])


def conv2d_im2col(x_nhwc, w_mat, b2, *, k, stride=1, pad=0, dil=1, relu=False,
                  out_dtype=jnp.float32):
    """Strided / valid / dilated 3x3 convs on small feature maps via im2col matmul."""
    N, H, W, Cin = x_nhwc.shape
    xb = x_nhwc.astype(jnp.bfloat16)
    if pad:
        xb = jnp.pad(xb, ((0, 0), (pad, pad), (pad, pad), (0, 0)))
    Hp, Wp = H + 2 * pad, W + 2 * pad
    OH = (Hp - dil * (k - 1) - 1) // stride + 1
    OW = (Wp - dil * (k - 1) - 1) // stride + 1
    patches = []
    for i in range(k):
        for j in range(k):
            sl = lax.slice(xb, (0, i * dil, j * dil, 0),
                           (N, i * dil + (OH - 1) * stride + 1,
                            j * dil + (OW - 1) * stride + 1, Cin),
                           (1, stride, stride, 1))
            patches.append(sl)
    a = jnp.concatenate(patches, axis=-1).reshape(N * OH * OW, k * k * Cin)
    out = matmul_bias(a, w_mat, b2, relu=relu, out_dtype=out_dtype)
    return out.reshape(N, OH, OW, w_mat.shape[1])


def max_pool(x_nhwc, kernel, stride, padding=0, ceil_mode=False):
    # TODO(synk): max-pool kept as plain-JAX reduce_window glue (not the hot path).
    N, H, W, C = x_nhwc.shape
    ph0 = pw0 = padding
    ph1 = pw1 = padding
    if ceil_mode:
        out_h = -(-(H + 2 * padding - kernel) // stride) + 1
        out_w = -(-(W + 2 * padding - kernel) // stride) + 1
        ph1 += max(0, (out_h - 1) * stride + kernel - (H + 2 * padding))
        pw1 += max(0, (out_w - 1) * stride + kernel - (W + 2 * padding))
    init = jnp.array(-jnp.inf, dtype=x_nhwc.dtype)
    return lax.reduce_window(
        x_nhwc, init, lax.max,
        window_dimensions=(1, kernel, kernel, 1),
        window_strides=(1, stride, stride, 1),
        padding=((0, 0), (ph0, ph1), (pw0, pw1), (0, 0)))


# ---------------------------------------------------------------------------
# Parameter construction (deterministic, in-script; weights pre-laid-out, bf16)
# ---------------------------------------------------------------------------

# (cin, cout, k, pad, dilation) for each conv in make_vgg(), in order
_VGG_CFG = [(3, 64, 3, 1, 1), (64, 64, 3, 1, 1),
            (64, 128, 3, 1, 1), (128, 128, 3, 1, 1),
            (128, 256, 3, 1, 1), (256, 256, 3, 1, 1), (256, 256, 3, 1, 1),
            (256, 512, 3, 1, 1), (512, 512, 3, 1, 1), (512, 512, 3, 1, 1),
            (512, 512, 3, 1, 1), (512, 512, 3, 1, 1), (512, 512, 3, 1, 1),
            (512, 1024, 3, 6, 6),    # conv6 (dilation 6) -> dilated im2col path
            (1024, 1024, 1, 0, 1)]   # conv7
# TODO(synk): source make_vgg() declares conv7 = Conv2d(512,1024,1) which cannot run on
# the 1024-channel conv6 output; standard SSD uses 1024->1024, implemented here.

_EXTRAS_CFG = [(1024, 256, 1), (256, 512, 3), (512, 128, 1), (128, 256, 3),
               (256, 128, 1), (128, 256, 3), (256, 128, 1), (128, 256, 3)]
_EXTRAS_CALL = [dict(), dict(stride=2, padding=1), dict(), dict(stride=2, padding=1),
                dict(), dict(), dict(), dict()]
_SRC_CHANNELS = [512, 1024, 512, 256, 256, 256]


def _vgg_layout(k, dil):
    return 'mm' if (k == 1 or dil > 1) else 'strip'


def _init_conv_raw(key, cin, cout, k):
    kw, kb = jax.random.split(key)
    std = (2.0 / (cin * k * k)) ** 0.5
    w = jax.random.normal(kw, (cout, cin, k, k), jnp.float32) * std
    b = jax.random.normal(kb, (cout,), jnp.float32) * 0.01
    return w, b


def _prep_same(w_oihw, b):
    """OIHW -> (K*K, Cin, Cout) bf16 taps + (1, Cout) f32 bias (strip-kernel layout)."""
    cout, cin, kh, kw = w_oihw.shape
    w = jnp.transpose(w_oihw, (2, 3, 1, 0)).reshape(kh * kw, cin, cout)
    return w.astype(jnp.bfloat16), b.reshape(1, cout).astype(jnp.float32)


def _prep_mm(w_oihw, b):
    """OIHW -> (K*K*Cin, Cout) bf16 matrix (im2col / 1x1 layout) + (1, Cout) bias."""
    cout, cin, kh, kw = w_oihw.shape
    w = jnp.transpose(w_oihw, (2, 3, 1, 0)).reshape(kh * kw * cin, cout)
    return w.astype(jnp.bfloat16), b.reshape(1, cout).astype(jnp.float32)


def init_params(key, cfg):
    classes_num = cfg['classes_num']
    dbox_num = cfg['dbox_num']
    keys = iter(jax.random.split(key, 64))

    vgg = []
    for (ci, co, k, pad, dil) in _VGG_CFG:
        w, b = _init_conv_raw(next(keys), ci, co, k)
        vgg.append(_prep_mm(w, b) if _vgg_layout(k, dil) == 'mm' else _prep_same(w, b))

    extras = []
    for (ci, co, k) in _EXTRAS_CFG:
        w, b = _init_conv_raw(next(keys), ci, co, k)
        extras.append(_prep_mm(w, b))

    # loc + conf heads merged per source: one 3x3 "same" conv with Cout = nb*(4+classes)
    heads = []
    for c, nb, f in zip(_SRC_CHANNELS, dbox_num, cfg['feature_maps']):
        lw, lb = _init_conv_raw(next(keys), c, nb * 4, 3)
        cw, cb = _init_conv_raw(next(keys), c, nb * classes_num, 3)
        wm = jnp.concatenate([lw, cw], axis=0)
        bm = jnp.concatenate([lb, cb], axis=0)
        heads.append(_prep_same(wm, bm) if f >= _HEAD_STRIP_MIN_FMAP
                     else _prep_mm(wm, bm))

    l2w = jnp.full((512,), 20.0, dtype=jnp.float32)  # L2Norm scale init
    return {'vgg': vgg, 'extras': extras, 'heads': heads, 'l2norm_weight': l2w}


def make_dbox_list(cfg):
    mean = []
    for k, f in enumerate(cfg['feature_maps']):
        for i, j in product(range(f), repeat=2):
            f_k = cfg['input_size'] / cfg['steps'][k]
            cx = (j + 0.5) / f_k
            cy = (i + 0.5) / f_k
            s_k = cfg['min_sizes'][k] / cfg['input_size']
            mean += [cx, cy, s_k, s_k]
            s_k_prime = sqrt(s_k * (cfg['max_sizes'][k] / cfg['input_size']))
            mean += [cx, cy, s_k_prime, s_k_prime]
            for ar in cfg['aspect_ratios'][k]:
                mean += [cx, cy, s_k * sqrt(ar), s_k / sqrt(ar)]
                mean += [cx, cy, s_k / sqrt(ar), s_k * sqrt(ar)]
    arr = np.clip(np.asarray(mean, dtype=np.float32).reshape(-1, 4), 0.0, 1.0)
    return jnp.asarray(arr)


# ---------------------------------------------------------------------------
# SSD forward (phase='train': returns (loc, conf, dbox_list))
# ---------------------------------------------------------------------------

def ssd_forward(x_nchw, params, dbox_list, *, classes_num, dbox_num, head_kinds):
    x = jnp.transpose(x_nchw, (0, 2, 3, 1)).astype(jnp.float32)  # NCHW -> NHWC
    vgg = params['vgg']

    def vc(x, i):
        (_, _, k, pad_, dil) = _VGG_CFG[i]
        w, b = vgg[i]
        # conv4_3 (i == 9) feeds L2Norm: keep it f32; all other ReLU convs emit bf16.
        odt = jnp.float32 if i == 9 else jnp.bfloat16
        if k == 1:
            return conv2d_1x1(x, w, b, relu=True, out_dtype=odt)
        if dil > 1:
            return conv2d_im2col(x, w, b, k=k, stride=1, pad=pad_, dil=dil,
                                 relu=True, out_dtype=odt)
        return conv2d_same(x, w, b, k=k, dil=dil, relu=True, out_dtype=odt)

    # vgg[0:23]  (conv1_1 .. conv4_3 + ReLU, with pools)
    x = vc(x, 0); x = vc(x, 1)
    x = max_pool(x, 2, 2)
    x = vc(x, 2); x = vc(x, 3)
    x = max_pool(x, 2, 2)
    x = vc(x, 4); x = vc(x, 5); x = vc(x, 6)
    x = max_pool(x, 2, 2, ceil_mode=True)
    x = vc(x, 7); x = vc(x, 8); x = vc(x, 9)
    out1 = l2norm(x, params['l2norm_weight'])
    sources = [out1]

    # vgg[23:]  (pool4, conv5_x, pool5, conv6, conv7)
    x = max_pool(x, 2, 2)
    x = vc(x, 10); x = vc(x, 11); x = vc(x, 12)
    x = max_pool(x, 3, 1, padding=1)
    x = vc(x, 13)   # conv6 (3x3, pad 6, dilation 6) + ReLU  -> dilated im2col
    x = vc(x, 14)   # conv7 (1x1) + ReLU
    sources.append(x)

    # extras: ReLU after every conv, collect every odd-indexed output
    for ke, ((w, b), (ci, co, kk), call_kw) in enumerate(
            zip(params['extras'], _EXTRAS_CFG, _EXTRAS_CALL)):
        if kk == 1:
            x = conv2d_1x1(x, w, b, relu=True, out_dtype=jnp.bfloat16)
        else:
            x = conv2d_im2col(x, w, b, k=kk,
                              stride=call_kw.get('stride', 1),
                              pad=call_kw.get('padding', 0),
                              relu=True, out_dtype=jnp.bfloat16)
        if ke % 2 == 1:
            sources.append(x)

    # merged loc+conf heads (one 'same' conv per source, split on channels; f32 out)
    locs, confs = [], []
    for src, (hw, hb), nb, kind in zip(sources, params['heads'], dbox_num, head_kinds):
        if kind == 'strip':
            h = conv2d_same(src, hw, hb, k=3, dil=1, relu=False,
                            out_dtype=jnp.float32)        # NHWC == permute(0,2,3,1)
        else:
            h = conv2d_im2col(src, hw, hb, k=3, stride=1, pad=1, dil=1,
                              relu=False, out_dtype=jnp.float32)
        locs.append(h[..., :nb * 4])
        confs.append(h[..., nb * 4:])

    N = x_nchw.shape[0]
    loc = jnp.concatenate([o.reshape(N, -1) for o in locs], axis=1).reshape(N, -1, 4)
    conf = jnp.concatenate([o.reshape(N, -1) for o in confs],
                           axis=1).reshape(N, -1, classes_num)
    return loc, conf, dbox_list
    # TODO(synk): phase='test' Detect / nonmaximum_suppress (data-dependent sort + while
    # loop NMS) has no clean Pallas equivalent and is intentionally not implemented.


# ---------------------------------------------------------------------------
# Small correctness self-check of the two conv paths vs lax.conv
# ---------------------------------------------------------------------------

def _self_check():
    key = jax.random.PRNGKey(42)
    k1, k2, k3 = jax.random.split(key, 3)
    x = jax.random.normal(k1, (1, 12, 12, 3), jnp.float32)
    w = jax.random.normal(k2, (16, 3, 3, 3), jnp.float32) * 0.2
    b = jax.random.normal(k3, (16,), jnp.float32) * 0.1
    xb = x.astype(jnp.bfloat16).astype(jnp.float32)
    wb = w.astype(jnp.bfloat16).astype(jnp.float32)

    # strip kernel (3x3, pad 1) vs XLA reference
    wt, b2 = _prep_same(w, b)
    got = conv2d_same(x, wt, b2, k=3, dil=1, relu=True, out_dtype=jnp.float32)
    ref = lax.conv_general_dilated(xb, wb, (1, 1), 'SAME',
                                   dimension_numbers=('NHWC', 'OIHW', 'NHWC'))
    ref = jnp.maximum(ref + b.reshape(1, 1, 1, -1), 0.0)
    np.testing.assert_allclose(np.asarray(got), np.asarray(ref), atol=3e-2, rtol=3e-2)

    # dilated 3x3 (pad 6, dil 6) via im2col vs XLA reference
    wm, bm2 = _prep_mm(w, b)
    got_d = conv2d_im2col(x, wm, bm2, k=3, stride=1, pad=6, dil=6,
                          relu=True, out_dtype=jnp.float32)
    ref_d = lax.conv_general_dilated(xb, wb, (1, 1), [(6, 6), (6, 6)],
                                     rhs_dilation=(6, 6),
                                     dimension_numbers=('NHWC', 'OIHW', 'NHWC'))
    ref_d = jnp.maximum(ref_d + b.reshape(1, 1, 1, -1), 0.0)
    np.testing.assert_allclose(np.asarray(got_d), np.asarray(ref_d),
                               atol=3e-2, rtol=3e-2)


# ---------------------------------------------------------------------------
# Main
# ---------------------------------------------------------------------------

if __name__ == "__main__":
    _self_check()

    # Smallest spatial size compatible with the extras chain (3x3 valid convs) is 268.
    IMG = 268
    cfg = {
        'classes_num': 21,
        'input_size': IMG,
        'dbox_num': [4, 6, 6, 6, 4, 4],
        'feature_maps': [34, 17, 9, 5, 3, 1],
        'steps': [8, 16, 30, 54, 90, 268],
        'min_sizes': [27, 54, 99, 145, 190, 236],
        'max_sizes': [54, 99, 145, 190, 236, 281],
        'aspect_ratios': [[2], [2, 3], [2, 3], [2, 3], [2], [2]],
    }
    head_kinds = tuple('strip' if f >= _HEAD_STRIP_MIN_FMAP else 'mm'
                       for f in cfg['feature_maps'])

    root = jax.random.PRNGKey(0)
    k_param, k_x = jax.random.split(root)
    params = init_params(k_param, cfg)
    dbox_list = make_dbox_list(cfg)

    x = jax.random.normal(k_x, (1, 3, IMG, IMG), jnp.float32)  # NCHW like PyTorch

    fwd = jax.jit(functools.partial(ssd_forward,
                                    classes_num=cfg['classes_num'],
                                    dbox_num=tuple(cfg['dbox_num']),
                                    head_kinds=head_kinds))
    loc, conf, dboxes = fwd(x, params, dbox_list)
    jax.block_until_ready((loc, conf, dboxes))

    n_dbox = dbox_list.shape[0]
    assert loc.shape == (1, n_dbox, 4), loc.shape
    assert conf.shape == (1, n_dbox, cfg['classes_num']), conf.shape
    assert dboxes.shape == (n_dbox, 4)
    print("KERNEL_OK")
</pallas_src>

<mosaic_0001>
module attributes {stable_mosaic.version = 11 : i64} {
  func.func @_conv_same_kernel(%arg0: i32, %arg1: i32, %arg2: memref<238x3xbf16, #tpu.memory_space<any>>, %arg3: memref<9x3x16xbf16, #tpu.memory_space<vmem>>, %arg4: memref<1x16xf32, #tpu.memory_space<vmem>>, %arg5: memref<208x16xf32, #tpu.memory_space<vmem>>, %arg6: memref<238x3xbf16, #tpu.memory_space<vmem>>, %arg7: memref<!tpu.dma_semaphore, #tpu.memory_space<semaphore_mem>>) attributes {dimension_semantics = [#tpu.dimension_semantics<parallel>, #tpu.dimension_semantics<arbitrary>], iteration_bounds = array<i64: 1, 1>, scalar_prefetch = 0 : i64, scratch_operands = 2 : i64, tpu.core_type = #tpu.core_type<tc>, window_params = [{}, {transform_indices = @transform_1, window_bounds = array<i64: 9, 3, 16>}, {transform_indices = @transform_2, window_bounds = array<i64: 1, 16>}, {transform_indices = @transform_3, window_bounds = array<i64: 208, 16>}]} {
    %c0_i32 = arith.constant 0 : i32
    %0 = arith.cmpi eq, %arg1, %c0_i32 : i32
    %1 = arith.extui %0 : i1 to i32
    %c0_i32_0 = arith.constant 0 : i32
    %2 = arith.cmpi ne, %1, %c0_i32_0 : i32
    scf.if %2 {
      %c208_i32 = arith.constant 208 : i32
      %53 = arith.muli %arg0, %c208_i32 : i32
      %54 = tpu.assume_multiple %53, 16 : i32
      %c0_i32_44 = arith.constant 0 : i32
      %55 = tpu.memref_slice %arg2[%54, %c0_i32_44] : memref<238x3xbf16, #tpu.memory_space<any>> -> memref<238x3xbf16, #tpu.memory_space<any>>
      tpu.enqueue_dma source(%55 : memref<238x3xbf16, #tpu.memory_space<any>>) target(%arg6 : memref<238x3xbf16, #tpu.memory_space<vmem>>) target_semaphore(%arg7 : memref<!tpu.dma_semaphore, #tpu.memory_space<semaphore_mem>>)
      %c0_i32_45 = arith.constant 0 : i32
      %56 = tpu.memref_slice %arg2[%54, %c0_i32_45] : memref<238x3xbf16, #tpu.memory_space<any>> -> memref<238x3xbf16, #tpu.memory_space<any>>
      tpu.wait_dma2 semaphore(%arg7 : memref<!tpu.dma_semaphore, #tpu.memory_space<semaphore_mem>>) src(%56 : memref<238x3xbf16, #tpu.memory_space<any>>) dst(%arg6 : memref<238x3xbf16, #tpu.memory_space<vmem>>)
    } else {
    }
    %c0 = arith.constant 0 : index
    %c0_1 = arith.constant 0 : index
    %3 = vector.load %arg6[%c0, %c0_1] : memref<238x3xbf16, #tpu.memory_space<vmem>>, vector<208x3xbf16>
    %c0_2 = arith.constant 0 : index
    %c0_3 = arith.constant 0 : index
    %c0_4 = arith.constant 0 : index
    %4 = vector.load %arg3[%c0_2, %c0_3, %c0_4] : memref<9x3x16xbf16, #tpu.memory_space<vmem>>, vector<1x3x16xbf16>
    %5 = vector.shape_cast %4 : vector<1x3x16xbf16> to vector<3x16xbf16>
    %cst = arith.constant dense<0.000000e+00> : vector<208x16xf32>
    %6 = tpu.matmul %3, %5, %cst {dimension_numbers = #tpu.dot_dimension_numbers<[1], [0], [0], [1], [0, 0, 1, 1], [], []>} : vector<208x3xbf16>, vector<3x16xbf16>, vector<208x16xf32> -> vector<208x16xf32>
    %c1 = arith.constant 1 : index
    %c0_5 = arith.constant 0 : index
    %7 = vector.load %arg6[%c1, %c0_5] : memref<238x3xbf16, #tpu.memory_space<vmem>>, vector<208x3xbf16>
    %c1_6 = arith.constant 1 : index
    %c0_7 = arith.constant 0 : index
    %c0_8 = arith.constant 0 : index
    %8 = vector.load %arg3[%c1_6, %c0_7, %c0_8] : memref<9x3x16xbf16, #tpu.memory_space<vmem>>, vector<1x3x16xbf16>
    %9 = vector.shape_cast %8 : vector<1x3x16xbf16> to vector<3x16xbf16>
    %cst_9 = arith.constant dense<0.000000e+00> : vector<208x16xf32>
    %10 = tpu.matmul %7, %9, %cst_9 {dimension_numbers = #tpu.dot_dimension_numbers<[1], [0], [0], [1], [0, 0, 1, 1], [], []>} : vector<208x3xbf16>, vector<3x16xbf16>, vector<208x16xf32> -> vector<208x16xf32>
    %11 = arith.addf %6, %10 : vector<208x16xf32>
    %c2 = arith.constant 2 : index
    %c0_10 = arith.constant 0 : index
    %12 = vector.load %arg6[%c2, %c0_10] : memref<238x3xbf16, #tpu.memory_space<vmem>>, vector<208x3xbf16>
    %c2_11 = arith.constant 2 : index
    %c0_12 = arith.constant 0 : index
    %c0_13 = arith.constant 0 : index
    %13 = vector.load %arg3[%c2_11, %c0_12, %c0_13] : memref<9x3x16xbf16, #tpu.memory_space<vmem>>, vector<1x3x16xbf16>
    %14 = vector.shape_cast %13 : vector<1x3x16xbf16> to vector<3x16xbf16>
    %cst_14 = arith.constant dense<0.000000e+00> : vector<208x16xf32>
    %15 = tpu.matmul %12, %14, %cst_14 {dimension_numbers = #tpu.dot_dimension_numbers<[1], [0], [0], [1], [0, 0, 1, 1], [], []>} : vector<208x3xbf16>, vector<3x16xbf16>, vector<208x16xf32> -> vector<208x16xf32>
    %16 = arith.addf %11, %15 : vector<208x16xf32>
    %c14 = arith.constant 14 : index
    %c0_15 = arith.constant 0 : index
    %17 = vector.load %arg6[%c14, %c0_15] : memref<238x3xbf16, #tpu.memory_space<vmem>>, vector<208x3xbf16>
    %c3 = arith.constant 3 : index
    %c0_16 = arith.constant 0 : index
    %c0_17 = arith.constant 0 : index
    %18 = vector.load %arg3[%c3, %c0_16, %c0_17] : memref<9x3x16xbf16, #tpu.memory_space<vmem>>, vector<1x3x16xbf16>
    %19 = vector.shape_cast %18 : vector<1x3x16xbf16> to vector<3x16xbf16>
    %cst_18 = arith.constant dense<0.000000e+00> : vector<208x16xf32>
    %20 = tpu.matmul %17, %19, %cst_18 {dimension_numbers = #tpu.dot_dimension_numbers<[1], [0], [0], [1], [0, 0, 1, 1], [], []>} : vector<208x3xbf16>, vector<3x16xbf16>, vector<208x16xf32> -> vector<208x16xf32>
    %21 = arith.addf %16, %20 : vector<208x16xf32>
    %c15 = arith.constant 15 : index
    %c0_19 = arith.constant 0 : index
    %22 = vector.load %arg6[%c15, %c0_19] : memref<238x3xbf16, #tpu.memory_space<vmem>>, vector<208x3xbf16>
    %c4 = arith.constant 4 : index
    %c0_20 = arith.constant 0 : index
    %c0_21 = arith.constant 0 : index
    %23 = vector.load %arg3[%c4, %c0_20, %c0_21] : memref<9x3x16xbf16, #tpu.memory_space<vmem>>, vector<1x3x16xbf16>
    %24 = vector.shape_cast %23 : vector<1x3x16xbf16> to vector<3x16xbf16>
    %cst_22 = arith.constant dense<0.000000e+00> : vector<208x16xf32>
    %25 = tpu.matmul %22, %24, %cst_22 {dimension_numbers = #tpu.dot_dimension_numbers<[1], [0], [0], [1], [0, 0, 1, 1], [], []>} : vector<208x3xbf16>, vector<3x16xbf16>, vector<208x16xf32> -> vector<208x16xf32>
    %26 = arith.addf %21, %25 : vector<208x16xf32>
    %c16 = arith.constant 16 : index
    %c0_23 = arith.constant 0 : index
    %27 = vector.load %arg6[%c16, %c0_23] : memref<238x3xbf16, #tpu.memory_space<vmem>>, vector<208x3xbf16>
    %c5 = arith.constant 5 : index
    %c0_24 = arith.constant 0 : index
    %c0_25 = arith.constant 0 : index
    %28 = vector.load %arg3[%c5, %c0_24, %c0_25] : memref<9x3x16xbf16, #tpu.memory_space<vmem>>, vector<1x3x16xbf16>
    %29 = vector.shape_cast %28 : vector<1x3x16xbf16> to vector<3x16xbf16>
    %cst_26 = arith.constant dense<0.000000e+00> : vector<208x16xf32>
    %30 = tpu.matmul %27, %29, %cst_26 {dimension_numbers = #tpu.dot_dimension_numbers<[1], [0], [0], [1], [0, 0, 1, 1], [], []>} : vector<208x3xbf16>, vector<3x16xbf16>, vector<208x16xf32> -> vector<208x16xf32>
    %31 = arith.addf %26, %30 : vector<208x16xf32>
    %c28 = arith.constant 28 : index
    %c0_27 = arith.constant 0 : index
    %32 = vector.load %arg6[%c28, %c0_27] : memref<238x3xbf16, #tpu.memory_space<vmem>>, vector<208x3xbf16>
    %c6 = arith.constant 6 : index
    %c0_28 = arith.constant 0 : index
    %c0_29 = arith.constant 0 : index
    %33 = vector.load %arg3[%c6, %c0_28, %c0_29] : memref<9x3x16xbf16, #tpu.memory_space<vmem>>, vector<1x3x16xbf16>
    %34 = vector.shape_cast %33 : vector<1x3x16xbf16> to vector<3x16xbf16>
    %cst_30 = arith.constant dense<0.000000e+00> : vector<208x16xf32>
    %35 = tpu.matmul %32, %34, %cst_30 {dimension_numbers = #tpu.dot_dimension_numbers<[1], [0], [0], [1], [0, 0, 1, 1], [], []>} : vector<208x3xbf16>, vector<3x16xbf16>, vector<208x16xf32> -> vector<208x16xf32>
    %36 = arith.addf %31, %35 : vector<208x16xf32>
    %c29 = arith.constant 29 : index
    %c0_31 = arith.constant 0 : index
    %37 = vector.load %arg6[%c29, %c0_31] : memref<238x3xbf16, #tpu.memory_space<vmem>>, vector<208x3xbf16>
    %c7 = arith.constant 7 : index
    %c0_32 = arith.constant 0 : index
    %c0_33 = arith.constant 0 : index
    %38 = vector.load %arg3[%c7, %c0_32, %c0_33] : memref<9x3x16xbf16, #tpu.memory_space<vmem>>, vector<1x3x16xbf16>
    %39 = vector.shape_cast %38 : vector<1x3x16xbf16> to vector<3x16xbf16>
    %cst_34 = arith.constant dense<0.000000e+00> : vector<208x16xf32>
    %40 = tpu.matmul %37, %39, %cst_34 {dimension_numbers = #tpu.dot_dimension_numbers<[1], [0], [0], [1], [0, 0, 1, 1], [], []>} : vector<208x3xbf16>, vector<3x16xbf16>, vector<208x16xf32> -> vector<208x16xf32>
    %41 = arith.addf %36, %40 : vector<208x16xf32>
    %c30 = arith.constant 30 : index
    %c0_35 = arith.constant 0 : index
    %42 = vector.load %arg6[%c30, %c0_35] : memref<238x3xbf16, #tpu.memory_space<vmem>>, vector<208x3xbf16>
    %c8 = arith.constant 8 : index
    %c0_36 = arith.constant 0 : index
    %c0_37 = arith.constant 0 : index
    %43 = vector.load %arg3[%c8, %c0_36, %c0_37] : memref<9x3x16xbf16, #tpu.memory_space<vmem>>, vector<1x3x16xbf16>
    %44 = vector.shape_cast %43 : vector<1x3x16xbf16> to vector<3x16xbf16>
    %cst_38 = arith.constant dense<0.000000e+00> : vector<208x16xf32>
    %45 = tpu.matmul %42, %44, %cst_38 {dimension_numbers = #tpu.dot_dimension_numbers<[1], [0], [0], [1], [0, 0, 1, 1], [], []>} : vector<208x3xbf16>, vector<3x16xbf16>, vector<208x16xf32> -> vector<208x16xf32>
    %46 = arith.addf %41, %45 : vector<208x16xf32>
    %c0_39 = arith.constant 0 : index
    %c0_40 = arith.constant 0 : index
    %47 = vector.load %arg4[%c0_39, %c0_40] : memref<1x16xf32, #tpu.memory_space<vmem>>, vector<1x16xf32>
    %48 = vector.broadcast %47 : vector<1x16xf32> to vector<208x16xf32>
    %49 = arith.addf %46, %48 : vector<208x16xf32>
    %cst_41 = arith.constant 0.000000e+00 : f32
    %50 = vector.broadcast %cst_41 : f32 to vector<208x16xf32>
    %51 = arith.maximumf %49, %50 : vector<208x16xf32>
    %c0_42 = arith.constant 0 : index
    %c0_43 = arith.constant 0 : index
    %52 = vector.load %arg5[%c0_42, %c0_43] : memref<208x16xf32, #tpu.memory_space<vmem>>, vector<208x16xf32>
    tpu.vector_store %arg5[%c0_42, %c0_43], %51 {strides = array<i32>} : memref<208x16xf32, #tpu.memory_space<vmem>>, vector<208x16xf32>,
    return
  }
  func.func @transform_1(%arg0: i32, %arg1: i32) -> (i32, i32, i32) {
    %c0_i32 = arith.constant 0 : i32
    %c0_i32_0 = arith.constant 0 : i32
    %c0_i32_1 = arith.constant 0 : i32
    return %c0_i32, %c0_i32_0, %arg1 : i32, i32, i32
  }
  func.func @transform_2(%arg0: i32, %arg1: i32) -> (i32, i32) {
    %c0_i32 = arith.constant 0 : i32
    %c0_i32_0 = arith.constant 0 : i32
    return %c0_i32, %arg1 : i32, i32
  }
  func.func @transform_3(%arg0: i32, %arg1: i32) -> (i32, i32) {
    %c0_i32 = arith.constant 0 : i32
    return %arg0, %arg1 : i32, i32
  }
}

</mosaic_0001>

<llo_original>
// kernel: tpu_custom_call.1
$region0: #{tpu_custom_call.1}
  #allocation0 [shape = 'u32[]', space=smem, size = 0x4, offset = 0x4, fixed_abs, tag = 'smem constant byte address 0x4 - core index']
  #allocation1 [shape = 'u32[144,128]{1,0:T(1,128)}', space=vmem, size = 0x12000, scoped, tag = 'internal scratch']
  #allocation2 [shape = 'bf16[238,3]{1,0:T(8,128)(2,1)}', space=vmem, size = 0xf000, scoped, tag = 'scratch operand']
  #allocation3 [shape = 's32[1]{0}', space=sflag, size = 0x4, scoped, tag = 'scratch operand']
  #allocation5 [shape = 's32[]', space=sflag, size = 0x4, offset = 0, fixed_abs, tag = 'sflag constant byte address 0x0 - dummy sync flag']
  %s0 = inlined_call_operand.vmem [shape: bf16[238,3], index: 0, kind: input, shape index: {}]
  %s1 = inlined_call_operand.vmem [shape: bf16[9,3,16], index: 1, kind: input, shape index: {}]
  %s2 = inlined_call_operand.vmem [shape: f32[1,16], index: 2, kind: input, shape index: {}]
  %s3 = inlined_call_operand.vmem [shape: f32[196,16], index: 3, kind: output, shape index: {}]
  %s4 = sld [smem:[#allocation0]]
  $region90: #{tpu_custom_call.1} parent=0
    _
  %s6 = ssub.s32 1, %s4
  %s7 = scalar_select 0, %s6, %s4
  $region1: #{tpu_custom_call.1} parent=0
    #allocation4 [shape = 'u8[106496]{0}', space=vmem, size = 0x1a000, scoped, tag = 'output window, operand 0, single buffered']
    // Predicated region
    $region2: #{tpu_custom_call.1} parent=1 // pred_check
      _
    $region3: #{tpu_custom_call.1} parent=1 // pred_check_branch
      %9 = sbr.rel (0) target = $region5
    $region4: #{tpu_custom_call.1} parent=1 // pred_region
      _
    $region5: #{tpu_custom_call.1} parent=1 // pred_fallthru
      _
    // Predicated region
    $region6: #{tpu_custom_call.1} parent=1 // pred_check
      _
    $region7: #{tpu_custom_call.1} parent=1 // pred_check_branch
      %11 = sbr.rel (0) target = $region9
    $region8: #{tpu_custom_call.1} parent=1 // pred_region
      _
    $region9: #{tpu_custom_call.1} parent=1 // pred_fallthru
      _
    %p13 = scmp.eq.s32.totalorder 0, 0
    // Predicated region
    $region10: #{tpu_custom_call.1} parent=1 // pred_check
      %p14 = pneg %p13
    $region11: #{tpu_custom_call.1} parent=1 // pred_check_branch
      %16 = sbr.rel (%p14) target = $region13
    $region12: #{tpu_custom_call.1} parent=1 // pred_region
      %s17 = smul.u32 0, 208
      %s18 = sshra.s32 %s17, 3
      %s19 = sand.u32 %s17, 7
      %s20 = smul.addr %s18, 4
      %s21 = scalar_lea.vmem %s0, %s20
      %p23 = scmp.lt.u32.totalorder 120, 8
      %p24 = pneg %p23
      // Predicated region
      $region14: #{tpu_custom_call.1} parent=12 // pred_check
        _
      $region15: #{tpu_custom_call.1} parent=12 // pred_check_branch
        %26 = sbr.rel (%p23) target = $region17
      $region16: #{tpu_custom_call.1} parent=12 // pred_region
        %s42 = sand.u32 120, 7
        %p43 = scmp.eq.s32.totalorder %s42, 0
        // Predicated region
        $region29: #{tpu_custom_call.1} parent=16 // pred_check
          %p44 = pneg %p43
        $region30: #{tpu_custom_call.1} parent=16 // pred_check_branch
          %46 = sbr.rel (%p44) target = $region32
        $region31: #{tpu_custom_call.1} parent=16 // pred_region
          loop: start=0, step=1, limit=1
          $region33: #{tpu_custom_call.1} parent=31 // loop_pre_header
            _
          $region34: #{tpu_custom_call.1} parent=31 // loop_header
            %s48 = sphi 0, %s52
            %p49 = scmp.ge.s32.totalorder %s48, 1
            %s53 = sphi %s21, %s21
            %s54 = sphi [#allocation2], [#allocation2]
          $region35: #{tpu_custom_call.1} parent=31 // loop_header_branch
            %51 = sbr.rel (%p49) target = $region39
          $region36: #{tpu_custom_call.1} parent=31 // loop_body
            %v55 = vld [vmem:[%s53] sm:$0xff]
            %56 = vst [vmem:[%s54] sm:$0xff] %v55
            %v57 = vld [vmem:[%s53 + $0x8] sm:$0xff]
            %58 = vst [vmem:[%s54 + $0x8] sm:$0xff] %v57
            %v59 = vld [vmem:[%s53 + $0x10] sm:$0xff]
            %60 = vst [vmem:[%s54 + $0x10] sm:$0xff] %v59
            %v61 = vld [vmem:[%s53 + $0x18] sm:$0xff]
            %62 = vst [vmem:[%s54 + $0x18] sm:$0xff] %v61
            %v63 = vld [vmem:[%s53 + $0x20] sm:$0xff]
            %64 = vst [vmem:[%s54 + $0x20] sm:$0xff] %v63
            %v65 = vld [vmem:[%s53 + $0x28] sm:$0xff]
            %66 = vst [vmem:[%s54 + $0x28] sm:$0xff] %v65
            %v67 = vld [vmem:[%s53 + $0x30] sm:$0xff]
            %68 = vst [vmem:[%s54 + $0x30] sm:$0xff] %v67
            %v69 = vld [vmem:[%s53 + $0x38] sm:$0xff]
            %70 = vst [vmem:[%s54 + $0x38] sm:$0xff] %v69
            %v71 = vld [vmem:[%s53 + $0x40] sm:$0xff]
            %72 = vst [vmem:[%s54 + $0x40] sm:$0xff] %v71
            %v73 = vld [vmem:[%s53 + $0x48] sm:$0xff]
            %74 = vst [vmem:[%s54 + $0x48] sm:$0xff] %v73
            %v75 = vld [vmem:[%s53 + $0x50] sm:$0xff]
            %76 = vst [vmem:[%s54 + $0x50] sm:$0xff] %v75
            %v77 = vld [vmem:[%s53 + $0x58] sm:$0xff]
            %78 = vst [vmem:[%s54 + $0x58] sm:$0xff] %v77
            %v79 = vld [vmem:[%s53 + $0x60] sm:$0xff]
            %80 = vst [vmem:[%s54 + $0x60] sm:$0xff] %v79
            %v81 = vld [vmem:[%s53 + $0x68] sm:$0xff]
            %82 = vst [vmem:[%s54 + $0x68] sm:$0xff] %v81
            %v83 = vld [vmem:[%s53 + $0x70] sm:$0xff]
            %84 = vst [vmem:[%s54 + $0x70] sm:$0xff] %v83
          $region37: #{tpu_custom_call.1} parent=31 // loop_footer
            %s52 = sadd.s32 1, %s48
          $region38: #{tpu_custom_call.1} parent=31 // loop_footer_branch
            %47 = sbr.rel target = $region34
          $region39: #{tpu_custom_call.1} parent=31 // loop_exit
            _
        $region32: #{tpu_custom_call.1} parent=16 // pred_fallthru
          _
        %p85 = pneg %p43
        // Predicated region
        $region40: #{tpu_custom_call.1} parent=16 // pred_check
          _
        $region41: #{tpu_custom_call.1} parent=16 // pred_check_branch
          %87 = sbr.rel (%p43) target = $region43
        $region42: #{tpu_custom_call.1} parent=16 // pred_region
          %s88 = sand.u32 120, 7
        $region43: #{tpu_custom_call.1} parent=16 // pred_fallthru
          _
      $region17: #{tpu_custom_call.1} parent=12 // pred_fallthru
        _
      // Predicated region
      $region18: #{tpu_custom_call.1} parent=12 // pred_check
        %p27 = pneg %p23
      $region19: #{tpu_custom_call.1} parent=12 // pred_check_branch
        %29 = sbr.rel (%p27) target = $region21
      $region20: #{tpu_custom_call.1} parent=12 // pred_region
        %s30 = sshll.u32 1, 120
        %s31 = ssub.s32 %s30, 1
        loop: start=0, step=1, limit=1
        $region22: #{tpu_custom_call.1} parent=20 // loop_pre_header
          _
        $region23: #{tpu_custom_call.1} parent=20 // loop_header
          %s33 = sphi 0, %s37
          %p34 = scmp.ge.s32.totalorder %s33, 1
          %s38 = sphi %s21, %s21
          %s39 = sphi [#allocation2], [#allocation2]
        $region24: #{tpu_custom_call.1} parent=20 // loop_header_branch
          %36 = sbr.rel (%p34) target = $region28
        $region25: #{tpu_custom_call.1} parent=20 // loop_body
          %v40 = vld [vmem:[%s38] sm:%s31]
          %41 = vst [vmem:[%s39] sm:%s31] %v40
        $region26: #{tpu_custom_call.1} parent=20 // loop_footer
          %s37 = sadd.s32 1, %s33
        $region27: #{tpu_custom_call.1} parent=20 // loop_footer_branch
          %32 = sbr.rel target = $region23
        $region28: #{tpu_custom_call.1} parent=20 // loop_exit
          _
      $region21: #{tpu_custom_call.1} parent=12 // pred_fallthru
        _
      // Predicated region
      $region44: #{tpu_custom_call.1} parent=12 // pred_check
        _
      $region45: #{tpu_custom_call.1} parent=12 // pred_check_branch
        %91 = sbr.rel (0) target = $region47
      $region46: #{tpu_custom_call.1} parent=12 // pred_region
        %92 = vsyncadd [#allocation3], 1920
      $region47: #{tpu_custom_call.1} parent=12 // pred_fallthru
        _
      %s93 = smul.u32 4, 30
      %s94 = smul.u32 %s93, 1
      %s95 = sshll.u32 %s94, 4
      %96 = dma.done [#allocation3], %s95
    $region13: #{tpu_custom_call.1} parent=1 // pred_fallthru
      _
    %v97 = vld [vmem:[#allocation2] sm:$0xf]
    %v98 = vld [vmem:[#allocation2 + $0x4] sm:$0xf]
    %v99 = vld [vmem:[#allocation2 + $0x8] sm:$0xf]
    %v100 = vld [vmem:[#allocation2 + $0xc] sm:$0xf]
    %v101 = vld [vmem:[#allocation2 + $0x10] sm:$0xf]
    %v102 = vld [vmem:[#allocation2 + $0x14] sm:$0xf]
    %v103 = vld [vmem:[#allocation2 + $0x18] sm:$0xf]
    %v104 = vld [vmem:[#allocation2 + $0x1c] sm:$0xf]
    %v105 = vld [vmem:[#allocation2 + $0x20] sm:$0xf]
    %v106 = vld [vmem:[#allocation2 + $0x24] sm:$0xf]
    %v107 = vld [vmem:[#allocation2 + $0x28] sm:$0xf]
    %v108 = vld [vmem:[#allocation2 + $0x2c] sm:$0xf]
    %v109 = vld [vmem:[#allocation2 + $0x30] sm:$0xf]
    %v110 = vld [vmem:[#allocation2 + $0x34] sm:$0xf]
    %v111 = vld [vmem:[#allocation2 + $0x38] sm:$0xf]
    %v112 = vld [vmem:[#allocation2 + $0x3c] sm:$0xf]
    %v113 = vld [vmem:[#allocation2 + $0x40] sm:$0xf]
    %v114 = vld [vmem:[#allocation2 + $0x44] sm:$0xf]
    %v115 = vld [vmem:[#allocation2 + $0x48] sm:$0xf]
    %v116 = vld [vmem:[#allocation2 + $0x4c] sm:$0xf]
    %v117 = vld [vmem:[#allocation2 + $0x50] sm:$0xf]
    %v118 = vld [vmem:[#allocation2 + $0x54] sm:$0xf]
    %v119 = vld [vmem:[#allocation2 + $0x58] sm:$0xf]
    %v120 = vld [vmem:[#allocation2 + $0x5c] sm:$0xf]
    %v121 = vld [vmem:[#allocation2 + $0x60] sm:$0xf]
    %v122 = vld [vmem:[#allocation2 + $0x64] sm:$0xf]
    %v123 = vld [vmem:[%s1] sm:$0x3]
    %v124 = vld [vmem:[#allocation2 + $0x68] sm:$0x1]
    %s125 = scalar_lea.vmem %s1, 2
    %v126 = vld [vmem:[%s125] sm:$0x3]
    %v154 = vunpack.c.l.b16 %v97
    %v155 = vunpack.c.l.b16 %v98
    %v156 = vunpack.c.l.b16 %v99
    %v157 = vunpack.c.l.b16 %v100
    %v158 = vunpack.c.l.b16 %v101
    %v159 = vunpack.c.l.b16 %v102
    %v160 = vunpack.c.l.b16 %v103
    %v161 = vunpack.c.l.b16 %v104
    %v162 = vunpack.c.l.b16 %v105
    %v163 = vunpack.c.l.b16 %v106
    %v164 = vunpack.c.l.b16 %v107
    %v165 = vunpack.c.l.b16 %v108
    %v166 = vunpack.c.l.b16 %v109
    %v167 = vunpack.c.l.b16 %v110
    %v168 = vunpack.c.l.b16 %v111
    %v169 = vunpack.c.l.b16 %v112
    %v170 = vunpack.c.l.b16 %v113
    %v171 = vunpack.c.l.b16 %v114
    %v172 = vunpack.c.l.b16 %v115
    %v173 = vunpack.c.l.b16 %v116
    %v174 = vunpack.c.l.b16 %v117
    %v175 = vunpack.c.l.b16 %v118
    %v176 = vunpack.c.l.b16 %v119
    %v177 = vunpack.c.l.b16 %v120
    %v178 = vunpack.c.l.b16 %v121
    %v179 = vunpack.c.l.b16 %v122
    %v180 = vunpack.c.l.b16 %v124
    %v181 = vpack.c.b16 %v155, %v154
    %v182 = vpack.c.b16 %v157, %v156
    %v183 = vpack.c.b16 %v159, %v158
    %v184 = vpack.c.b16 %v161, %v160
    %v185 = vpack.c.b16 %v163, %v162
    %v186 = vpack.c.b16 %v165, %v164
    %v187 = vpack.c.b16 %v167, %v166
    %v188 = vpack.c.b16 %v169, %v168
    %v189 = vpack.c.b16 %v171, %v170
    %v190 = vpack.c.b16 %v173, %v172
    %v191 = vpack.c.b16 %v175, %v174
    %v192 = vpack.c.b16 %v177, %v176
    %v193 = vpack.c.b16 %v179, %v178
    %v194 = vpack.c.b16 %v180, %v180
    %vm195 = vsmask.f32 7424
    %v197 = vshrl.u32 %v181, 16
    %v199 = vshll.u32 %v181, 16
    %v201 = vrot.slane %v199, 1
    %v202 = vor.u32 %v197, %v201
    %v204 = vshll.u32 %v182, 16
    %v206 = vrot.slane %v204, 1
    %v207 = vsel %vm195, %v202, %v206
    %v208 = vshrl.u32 %v182, 16
    %v210 = vor.u32 %v208, %v206
    %v212 = vshll.u32 %v183, 16
    %v214 = vrot.slane %v212, 1
    %v215 = vsel %vm195, %v210, %v214
    %v216 = vshrl.u32 %v183, 16
    %v218 = vor.u32 %v216, %v214
    %v220 = vshll.u32 %v184, 16
    %v222 = vrot.slane %v220, 1
    %v223 = vsel %vm195, %v218, %v222
    %v224 = vshrl.u32 %v184, 16
    %v226 = vor.u32 %v224, %v222
    %v228 = vshll.u32 %v185, 16
    %v230 = vrot.slane %v228, 1
    %v231 = vsel %vm195, %v226, %v230
    %v232 = vshrl.u32 %v185, 16
    %v234 = vor.u32 %v232, %v230
    %v236 = vshll.u32 %v186, 16
    %v238 = vrot.slane %v236, 1
    %v239 = vsel %vm195, %v234, %v238
    %v240 = vshrl.u32 %v186, 16
    %v242 = vor.u32 %v240, %v238
    %v244 = vshll.u32 %v187, 16
    %v246 = vrot.slane %v244, 1
    %v247 = vsel %vm195, %v242, %v246
    %v248 = vshrl.u32 %v187, 16
    %v250 = vor.u32 %v248, %v246
    %v252 = vshll.u32 %v188, 16
    %v254 = vrot.slane %v252, 1
    %v255 = vsel %vm195, %v250, %v254
    %v256 = vshrl.u32 %v188, 16
    %v258 = vor.u32 %v256, %v254
    %v260 = vshll.u32 %v189, 16
    %v262 = vrot.slane %v260, 1
    %v263 = vsel %vm195, %v258, %v262
    %v264 = vshrl.u32 %v189, 16
    %v266 = vor.u32 %v264, %v262
    %v268 = vshll.u32 %v190, 16
    %v270 = vrot.slane %v268, 1
    %v271 = vsel %vm195, %v266, %v270
    %v272 = vshrl.u32 %v190, 16
    %v274 = vor.u32 %v272, %v270
    %v276 = vshll.u32 %v191, 16
    %v278 = vrot.slane %v276, 1
    %v279 = vsel %vm195, %v274, %v278
    %v280 = vshrl.u32 %v191, 16
    %v282 = vor.u32 %v280, %v278
    %v284 = vshll.u32 %v192, 16
    %v286 = vrot.slane %v284, 1
    %v287 = vsel %vm195, %v282, %v286
    %v288 = vshrl.u32 %v192, 16
    %v290 = vor.u32 %v288, %v286
    %v292 = vshll.u32 %v193, 16
    %v294 = vrot.slane %v292, 1
    %v295 = vsel %vm195, %v290, %v294
    %v296 = vshrl.u32 %v193, 16
    %v298 = vor.u32 %v296, %v294
    %v300 = vshll.u32 %v194, 16
    %v302 = vrot.slane %v300, 1
    %v303 = vsel %vm195, %v298, %v302
    %vm304 = vcmask 23552
    %v306 = vsel %vm304, %v207, 0
    %v309 = vsel %vm304, %v215, 0
    %v312 = vsel %vm304, %v223, 0
    %v315 = vsel %vm304, %v231, 0
    %v318 = vsel %vm304, %v239, 0
    %v321 = vsel %vm304, %v247, 0
    %v324 = vsel %vm304, %v255, 0
    %v327 = vsel %vm304, %v263, 0
    %v330 = vsel %vm304, %v271, 0
    %v333 = vsel %vm304, %v279, 0
    %v336 = vsel %vm304, %v287, 0
    %v339 = vsel %vm304, %v295, 0
    %v342 = vsel %vm304, %v303, 0
    %vm344 = vcmask 1040384
    %vm345 = vcmask 1041408
    %v346 = vsel %vm344, 4294967295, 65535
    %v347 = vsel %vm345, %v346, 0
    %v349 = vand.u32 %v126, %v347
    %351 = vmatprep.subr.bf16.mxu0 0
    %352 = vmatpush1.bf16.msra.mxu0 0
    %353 = vmatprep.subr.bf16.mxu0 0
    %354 = vmatpush1.bf16.msra.mxu0 0
    %355 = vmatprep.subr.bf16.mxu0 0
    %356 = vmatpush1.bf16.msra.mxu0 0
    %357 = vmatprep.subr.bf16.mxu0 0
    %358 = vmatpush1.bf16.msra.mxu0 0
    %359 = vmatprep.subr.bf16.mxu0 0
    %360 = vmatpush1.bf16.msra.mxu0 0
    %361 = vmatprep.subr.bf16.mxu0 0
    %362 = vmatpush1.bf16.msra.mxu0 0
    %363 = vmatprep.subr.bf16.mxu0 0
    %364 = vmatpush1.bf16.msra.mxu0 0
    %365 = vmatprep.subr.bf16.mxu0 0
    %366 = vmatpush1.bf16.msra.mxu0 %v349
    %367 = vmatprep.subr.bf16.mxu0 0
    %368 = vmatpush2.bf16.msra.mxu0 0
    %369 = vmatprep.subr.bf16.mxu0 0
    %370 = vmatpush2.bf16.msra.mxu0 0
    %371 = vmatprep.subr.bf16.mxu0 0
    %372 = vmatpush2.bf16.msra.mxu0 0
    %373 = vmatprep.subr.bf16.mxu0 0
    %374 = vmatpush2.bf16.msra.mxu0 0
    %375 = vmatprep.subr.bf16.mxu0 0
    %376 = vmatpush2.bf16.msra.mxu0 0
    %377 = vmatprep.subr.bf16.mxu0 0
    %378 = vmatpush2.bf16.msra.mxu0 0
    %379 = vmatprep.subr.bf16.mxu0 0
    %380 = vmatpush2.bf16.msra.mxu0 0
    %381 = vmatprep.subr.bf16.mxu0 0
    %382 = vmatpush2.bf16.msra.mxu0 0
    %383 = vmatprep.mubr.bf16.mxu0 0
    %384 = vmatmul.mubr.bf16.gmra.mxu0 %v306
    %v385 = vpop.f32.mrf.mxu0
    %v386 = vadd.f32 0.0, %v385
    %v387 = vpop.f32.mrf.mxu0
    %v388 = vpop.f32.mrf.mxu0
    %v389 = vadd.f32 0.0, %v388
    %v390 = vpop.f32.mrf.mxu0
    %391 = vmatprep.mubr.bf16.mxu0 0
    %392 = vmatmul.mubr.bf16.gmra.mxu0 %v309
    %v393 = vpop.f32.mrf.mxu0
    %v394 = vadd.f32 0.0, %v393
    %v395 = vpop.f32.mrf.mxu0
    %v396 = vpop.f32.mrf.mxu0
    %v397 = vadd.f32 0.0, %v396
    %v398 = vpop.f32.mrf.mxu0
    %399 = vmatprep.mubr.bf16.mxu0 0
    %400 = vmatmul.mubr.bf16.gmra.mxu0 %v312
    %v401 = vpop.f32.mrf.mxu0
    %v402 = vadd.f32 0.0, %v401
    %v403 = vpop.f32.mrf.mxu0
    %v404 = vpop.f32.mrf.mxu0
    %v405 = vadd.f32 0.0, %v404
    %v406 = vpop.f32.mrf.mxu0
    %407 = vmatprep.mubr.bf16.mxu0 0
    %408 = vmatmul.mubr.bf16.gmra.mxu0 %v315
    %v409 = vpop.f32.mrf.mxu0
    %v410 = vadd.f32 0.0, %v409
    %v411 = vpop.f32.mrf.mxu0
    %v412 = vpop.f32.mrf.mxu0
    %v413 = vadd.f32 0.0, %v412
    %v414 = vpop.f32.mrf.mxu0
    %415 = vmatprep.mubr.bf16.mxu0 0
    %416 = vmatmul.mubr.bf16.gmra.mxu0 %v318
    %v417 = vpop.f32.mrf.mxu0
    %v418 = vadd.f32 0.0, %v417
    %v419 = vpop.f32.mrf.mxu0
    %v420 = vpop.f32.mrf.mxu0
    %v421 = vadd.f32 0.0, %v420
    %v422 = vpop.f32.mrf.mxu0
    %423 = vmatprep.mubr.bf16.mxu0 0
    %424 = vmatmul.mubr.bf16.gmra.mxu0 %v321
    %v425 = vpop.f32.mrf.mxu0
    %v426 = vadd.f32 0.0, %v425
    %v427 = vpop.f32.mrf.mxu0
    %v428 = vpop.f32.mrf.mxu0
    %v429 = vadd.f32 0.0, %v428
    %v430 = vpop.f32.mrf.mxu0
    %431 = vmatprep.mubr.bf16.mxu0 0
    %432 = vmatmul.mubr.bf16.gmra.mxu0 %v324
    %v433 = vpop.f32.mrf.mxu0
    %v434 = vadd.f32 0.0, %v433
    %v435 = vpop.f32.mrf.mxu0
    %v436 = vpop.f32.mrf.mxu0
    %v437 = vadd.f32 0.0, %v436
    %v438 = vpop.f32.mrf.mxu0
    %439 = vmatprep.mubr.bf16.mxu0 0
    %440 = vmatmul.mubr.bf16.gmra.mxu0 %v327
    %v441 = vpop.f32.mrf.mxu0
    %v442 = vadd.f32 0.0, %v441
    %v443 = vpop.f32.mrf.mxu0
    %v444 = vpop.f32.mrf.mxu0
    %v445 = vadd.f32 0.0, %v444
    %v446 = vpop.f32.mrf.mxu0
    %447 = vmatprep.mubr.bf16.mxu0 0
    %448 = vmatmul.mubr.bf16.gmra.mxu0 %v330
    %v449 = vpop.f32.mrf.mxu0
    %v450 = vadd.f32 0.0, %v449
    %v451 = vpop.f32.mrf.mxu0
    %v452 = vpop.f32.mrf.mxu0
    %v453 = vadd.f32 0.0, %v452
    %v454 = vpop.f32.mrf.mxu0
    %455 = vmatprep.mubr.bf16.mxu0 0
    %456 = vmatmul.mubr.bf16.gmra.mxu0 %v333
    %v457 = vpop.f32.mrf.mxu0
    %v458 = vadd.f32 0.0, %v457
    %v459 = vpop.f32.mrf.mxu0
    %v460 = vpop.f32.mrf.mxu0
    %v461 = vadd.f32 0.0, %v460
    %v462 = vpop.f32.mrf.mxu0
    %463 = vmatprep.mubr.bf16.mxu0 0
    %464 = vmatmul.mubr.bf16.gmra.mxu0 %v336
    %v465 = vpop.f32.mrf.mxu0
    %v466 = vadd.f32 0.0, %v465
    %v467 = vpop.f32.mrf.mxu0
    %v468 = vpop.f32.mrf.mxu0
    %v469 = vadd.f32 0.0, %v468
    %v470 = vpop.f32.mrf.mxu0
    %471 = vmatprep.mubr.bf16.mxu0 0
    %472 = vmatmul.mubr.bf16.gmra.mxu0 %v339
    %v473 = vpop.f32.mrf.mxu0
    %v474 = vadd.f32 0.0, %v473
    %v475 = vpop.f32.mrf.mxu0
    %v476 = vpop.f32.mrf.mxu0
    %v477 = vadd.f32 0.0, %v476
    %v478 = vpop.f32.mrf.mxu0
    %479 = vmatprep.mubr.bf16.mxu0 0
    %480 = vmatmul.mubr.bf16.gmra.mxu0 %v342
    %v481 = vpop.f32.mrf.mxu0
    %v482 = vadd.f32 0.0, %v481
    %v483 = vpop.f32.mrf.mxu0
    %v484 = vpop.f32.mrf.mxu0
    %v485 = vadd.f32 0.0, %v484
    %v486 = vpop.f32.mrf.mxu0
    %487 = vdwg.mxu0
    %v488 = vsel %vm304, %v181, 0
    %v490 = vsel %vm304, %v182, 0
    %v492 = vsel %vm304, %v183, 0
    %v494 = vsel %vm304, %v184, 0
    %v496 = vsel %vm304, %v185, 0
    %v498 = vsel %vm304, %v186, 0
    %v500 = vsel %vm304, %v187, 0
    %v502 = vsel %vm304, %v188, 0
    %v504 = vsel %vm304, %v189, 0
    %v506 = vsel %vm304, %v190, 0
    %v508 = vsel %vm304, %v191, 0
    %v510 = vsel %vm304, %v192, 0
    %v512 = vsel %vm304, %v193, 0
    %v515 = vand.u32 %v123, %v347
    %517 = vmatprep.subr.bf16.mxu0 0
    %518 = vmatpush1.bf16.msra.mxu0 0
    %519 = vmatprep.subr.bf16.mxu0 0
    %520 = vmatpush1.bf16.msra.mxu0 0
    %521 = vmatprep.subr.bf16.mxu0 0
    %522 = vmatpush1.bf16.msra.mxu0 0
    %523 = vmatprep.subr.bf16.mxu0 0
    %524 = vmatpush1.bf16.msra.mxu0 0
    %525 = vmatprep.subr.bf16.mxu0 0
    %526 = vmatpush1.bf16.msra.mxu0 0
    %527 = vmatprep.subr.bf16.mxu0 0
    %528 = vmatpush1.bf16.msra.mxu0 0
    %529 = vmatprep.subr.bf16.mxu0 0
    %530 = vmatpush1.bf16.msra.mxu0 0
    %531 = vmatprep.subr.bf16.mxu0 0
    %532 = vmatpush1.bf16.msra.mxu0 %v515
    %533 = vmatprep.subr.bf16.mxu0 0
    %534 = vmatpush2.bf16.msra.mxu0 0
    %535 = vmatprep.subr.bf16.mxu0 0
    %536 = vmatpush2.bf16.msra.mxu0 0
    %537 = vmatprep.subr.bf16.mxu0 0
    %538 = vmatpush2.bf16.msra.mxu0 0
    %539 = vmatprep.subr.bf16.mxu0 0
    %540 = vmatpush2.bf16.msra.mxu0 0
    %541 = vmatprep.subr.bf16.mxu0 0
    %542 = vmatpush2.bf16.msra.mxu0 0
    %543 = vmatprep.subr.bf16.mxu0 0
    %544 = vmatpush2.bf16.msra.mxu0 0
    %545 = vmatprep.subr.bf16.mxu0 0
    %546 = vmatpush2.bf16.msra.mxu0 0
    %547 = vmatprep.subr.bf16.mxu0 0
    %548 = vmatpush2.bf16.msra.mxu0 0
    %549 = vmatprep.mubr.bf16.mxu0 0
    %550 = vmatmul.mubr.bf16.gmra.mxu0 %v488
    %v551 = vpop.f32.mrf.mxu0
    %v552 = vadd.f32 %v386, %v551
    %v553 = vpop.f32.mrf.mxu0
    %v554 = vpop.f32.mrf.mxu0
    %v555 = vadd.f32 %v389, %v554
    %v556 = vpop.f32.mrf.mxu0
    %557 = vmatprep.mubr.bf16.mxu0 0
    %558 = vmatmul.mubr.bf16.gmra.mxu0 %v490
    %v559 = vpop.f32.mrf.mxu0
    %v560 = vadd.f32 %v394, %v559
    %v561 = vpop.f32.mrf.mxu0
    %v562 = vpop.f32.mrf.mxu0
    %v563 = vadd.f32 %v397, %v562
    %v564 = vpop.f32.mrf.mxu0
    %565 = vmatprep.mubr.bf16.mxu0 0
    %566 = vmatmul.mubr.bf16.gmra.mxu0 %v492
    %v567 = vpop.f32.mrf.mxu0
    %v568 = vadd.f32 %v402, %v567
    %v569 = vpop.f32.mrf.mxu0
    %v570 = vpop.f32.mrf.mxu0
    %v571 = vadd.f32 %v405, %v570
    %v572 = vpop.f32.mrf.mxu0
    %573 = vmatprep.mubr.bf16.mxu0 0
    %574 = vmatmul.mubr.bf16.gmra.mxu0 %v494
    %v575 = vpop.f32.mrf.mxu0
    %v576 = vadd.f32 %v410, %v575
    %v577 = vpop.f32.mrf.mxu0
    %v578 = vpop.f32.mrf.mxu0
    %v579 = vadd.f32 %v413, %v578
    %v580 = vpop.f32.mrf.mxu0
    %581 = vmatprep.mubr.bf16.mxu0 0
    %582 = vmatmul.mubr.bf16.gmra.mxu0 %v496
    %v583 = vpop.f32.mrf.mxu0
    %v584 = vadd.f32 %v418, %v583
    %v585 = vpop.f32.mrf.mxu0
    %v586 = vpop.f32.mrf.mxu0
    %v587 = vadd.f32 %v421, %v586
    %v588 = vpop.f32.mrf.mxu0
    %589 = vmatprep.mubr.bf16.mxu0 0
    %590 = vmatmul.mubr.bf16.gmra.mxu0 %v498
    %v591 = vpop.f32.mrf.mxu0
    %v592 = vadd.f32 %v426, %v591
    %v593 = vpop.f32.mrf.mxu0
    %v594 = vpop.f32.mrf.mxu0
    %v595 = vadd.f32 %v429, %v594
    %v596 = vpop.f32.mrf.mxu0
    %597 = vmatprep.mubr.bf16.mxu0 0
    %598 = vmatmul.mubr.bf16.gmra.mxu0 %v500
    %v599 = vpop.f32.mrf.mxu0
    %v600 = vadd.f32 %v434, %v599
    %v601 = vpop.f32.mrf.mxu0
    %v602 = vpop.f32.mrf.mxu0
    %v603 = vadd.f32 %v437, %v602
    %v604 = vpop.f32.mrf.mxu0
    %605 = vmatprep.mubr.bf16.mxu0 0
    %606 = vmatmul.mubr.bf16.gmra.mxu0 %v502
    %v607 = vpop.f32.mrf.mxu0
    %v608 = vadd.f32 %v442, %v607
    %v609 = vpop.f32.mrf.mxu0
    %v610 = vpop.f32.mrf.mxu0
    %v611 = vadd.f32 %v445, %v610
    %v612 = vpop.f32.mrf.mxu0
    %613 = vmatprep.mubr.bf16.mxu0 0
    %614 = vmatmul.mubr.bf16.gmra.mxu0 %v504
    %v615 = vpop.f32.mrf.mxu0
    %v616 = vadd.f32 %v450, %v615
    %v617 = vpop.f32.mrf.mxu0
    %v618 = vpop.f32.mrf.mxu0
    %v619 = vadd.f32 %v453, %v618
    %v620 = vpop.f32.mrf.mxu0
    %621 = vmatprep.mubr.bf16.mxu0 0
    %622 = vmatmul.mubr.bf16.gmra.mxu0 %v506
    %v623 = vpop.f32.mrf.mxu0
    %v624 = vadd.f32 %v458, %v623
    %v625 = vpop.f32.mrf.mxu0
    %v626 = vpop.f32.mrf.mxu0
    %v627 = vadd.f32 %v461, %v626
    %v628 = vpop.f32.mrf.mxu0
    %629 = vmatprep.mubr.bf16.mxu0 0
    %630 = vmatmul.mubr.bf16.gmra.mxu0 %v508
    %v631 = vpop.f32.mrf.mxu0
    %v632 = vadd.f32 %v466, %v631
    %v633 = vpop.f32.mrf.mxu0
    %v634 = vpop.f32.mrf.mxu0
    %v635 = vadd.f32 %v469, %v634
    %v636 = vpop.f32.mrf.mxu0
    %637 = vmatprep.mubr.bf16.mxu0 0
    %638 = vmatmul.mubr.bf16.gmra.mxu0 %v510
    %v639 = vpop.f32.mrf.mxu0
    %v640 = vadd.f32 %v474, %v639
    %v641 = vpop.f32.mrf.mxu0
    %v642 = vpop.f32.mrf.mxu0
    %v643 = vadd.f32 %v477, %v642
    %v644 = vpop.f32.mrf.mxu0
    %645 = vmatprep.mubr.bf16.mxu0 0
    %646 = vmatmul.mubr.bf16.gmra.mxu0 %v512
    %v647 = vpop.f32.mrf.mxu0
    %v648 = vadd.f32 %v482, %v647
    %v649 = vpop.f32.mrf.mxu0
    %v650 = vpop.f32.mrf.mxu0
    %v651 = vadd.f32 %v485, %v650
    %v652 = vpop.f32.mrf.mxu0
    %653 = vdwg.mxu0
    %v654 = vld [vmem:[#allocation2] sm:$0xe]
    %s655 = scalar_lea.vmem %s1, 4
    %v656 = vld [vmem:[%s655] sm:$0x3]
    %v658 = vunpack.c.l.b16 %v654
    %v659 = vpack.c.b16 %v155, %v658
    %vm660 = vcmask 1046528
    %v661 = vrot.slane %v659, 1
    %v662 = vrot.slane %v182, 1
    %v663 = vsel %vm660, %v661, %v662
    %v664 = vrot.slane %v183, 1
    %v665 = vsel %vm660, %v662, %v664
    %v666 = vrot.slane %v184, 1
    %v667 = vsel %vm660, %v664, %v666
    %v668 = vrot.slane %v185, 1
    %v669 = vsel %vm660, %v666, %v668
    %v670 = vrot.slane %v186, 1
    %v671 = vsel %vm660, %v668, %v670
    %v672 = vrot.slane %v187, 1
    %v673 = vsel %vm660, %v670, %v672
    %v674 = vrot.slane %v188, 1
    %v675 = vsel %vm660, %v672, %v674
    %v676 = vrot.slane %v189, 1
    %v677 = vsel %vm660, %v674, %v676
    %v678 = vrot.slane %v190, 1
    %v679 = vsel %vm660, %v676, %v678
    %v680 = vrot.slane %v191, 1
    %v681 = vsel %vm660, %v678, %v680
    %v682 = vrot.slane %v192, 1
    %v683 = vsel %vm660, %v680, %v682
    %v684 = vrot.slane %v193, 1
    %v685 = vsel %vm660, %v682, %v684
    %v686 = vrot.slane %v194, 1
    %v687 = vsel %vm660, %v684, %v686
    %v689 = vsel %vm304, %v663, 0
    %v692 = vsel %vm304, %v665, 0
    %v695 = vsel %vm304, %v667, 0
    %v698 = vsel %vm304, %v669, 0
    %v701 = vsel %vm304, %v671, 0
    %v704 = vsel %vm304, %v673, 0
    %v707 = vsel %vm304, %v675, 0
    %v710 = vsel %vm304, %v677, 0
    %v713 = vsel %vm304, %v679, 0
    %v716 = vsel %vm304, %v681, 0
    %v719 = vsel %vm304, %v683, 0
    %v722 = vsel %vm304, %v685, 0
    %v725 = vsel %vm304, %v687, 0
    %v728 = vand.u32 %v656, %v347
    %730 = vmatprep.subr.bf16.mxu0 0
    %731 = vmatpush1.bf16.msra.mxu0 0
    %732 = vmatprep.subr.bf16.mxu0 0
    %733 = vmatpush1.bf16.msra.mxu0 0
    %734 = vmatprep.subr.bf16.mxu0 0
    %735 = vmatpush1.bf16.msra.mxu0 0
    %736 = vmatprep.subr.bf16.mxu0 0
    %737 = vmatpush1.bf16.msra.mxu0 0
    %738 = vmatprep.subr.bf16.mxu0 0
    %739 = vmatpush1.bf16.msra.mxu0 0
    %740 = vmatprep.subr.bf16.mxu0 0
    %741 = vmatpush1.bf16.msra.mxu0 0
    %742 = vmatprep.subr.bf16.mxu0 0
    %743 = vmatpush1.bf16.msra.mxu0 0
    %744 = vmatprep.subr.bf16.mxu0 0
    %745 = vmatpush1.bf16.msra.mxu0 %v728
    %746 = vmatprep.subr.bf16.mxu0 0
    %747 = vmatpush2.bf16.msra.mxu0 0
    %748 = vmatprep.subr.bf16.mxu0 0
    %749 = vmatpush2.bf16.msra.mxu0 0
    %750 = vmatprep.subr.bf16.mxu0 0
    %751 = vmatpush2.bf16.msra.mxu0 0
    %752 = vmatprep.subr.bf16.mxu0 0
    %753 = vmatpush2.bf16.msra.mxu0 0
    %754 = vmatprep.subr.bf16.mxu0 0
    %755 = vmatpush2.bf16.msra.mxu0 0
    %756 = vmatprep.subr.bf16.mxu0 0
    %757 = vmatpush2.bf16.msra.mxu0 0
    %758 = vmatprep.subr.bf16.mxu0 0
    %759 = vmatpush2.bf16.msra.mxu0 0
    %760 = vmatprep.subr.bf16.mxu0 0
    %761 = vmatpush2.bf16.msra.mxu0 0
    %762 = vmatprep.mubr.bf16.mxu0 0
    %763 = vmatmul.mubr.bf16.gmra.mxu0 %v689
    %v764 = vpop.f32.mrf.mxu0
    %v765 = vadd.f32 0.0, %v764
    %v766 = vpop.f32.mrf.mxu0
    %v767 = vpop.f32.mrf.mxu0
    %v768 = vadd.f32 0.0, %v767
    %v769 = vpop.f32.mrf.mxu0
    %770 = vmatprep.mubr.bf16.mxu0 0
    %771 = vmatmul.mubr.bf16.gmra.mxu0 %v692
    %v772 = vpop.f32.mrf.mxu0
    %v773 = vadd.f32 0.0, %v772
    %v774 = vpop.f32.mrf.mxu0
    %v775 = vpop.f32.mrf.mxu0
    %v776 = vadd.f32 0.0, %v775
    %v777 = vpop.f32.mrf.mxu0
    %778 = vmatprep.mubr.bf16.mxu0 0
    %779 = vmatmul.mubr.bf16.gmra.mxu0 %v695
    %v780 = vpop.f32.mrf.mxu0
    %v781 = vadd.f32 0.0, %v780
    %v782 = vpop.f32.mrf.mxu0
    %v783 = vpop.f32.mrf.mxu0
    %v784 = vadd.f32 0.0, %v783
    %v785 = vpop.f32.mrf.mxu0
    %786 = vmatprep.mubr.bf16.mxu0 0
    %787 = vmatmul.mubr.bf16.gmra.mxu0 %v698
    %v788 = vpop.f32.mrf.mxu0
    %v789 = vadd.f32 0.0, %v788
    %v790 = vpop.f32.mrf.mxu0
    %v791 = vpop.f32.mrf.mxu0
    %v792 = vadd.f32 0.0, %v791
    %v793 = vpop.f32.mrf.mxu0
    %794 = vmatprep.mubr.bf16.mxu0 0
    %795 = vmatmul.mubr.bf16.gmra.mxu0 %v701
    %v796 = vpop.f32.mrf.mxu0
    %v797 = vadd.f32 0.0, %v796
    %v798 = vpop.f32.mrf.mxu0
    %v799 = vpop.f32.mrf.mxu0
    %v800 = vadd.f32 0.0, %v799
    %v801 = vpop.f32.mrf.mxu0
    %802 = vmatprep.mubr.bf16.mxu0 0
    %803 = vmatmul.mubr.bf16.gmra.mxu0 %v704
    %v804 = vpop.f32.mrf.mxu0
    %v805 = vadd.f32 0.0, %v804
    %v806 = vpop.f32.mrf.mxu0
    %v807 = vpop.f32.mrf.mxu0
    %v808 = vadd.f32 0.0, %v807
    %v809 = vpop.f32.mrf.mxu0
    %810 = vmatprep.mubr.bf16.mxu0 0
    %811 = vmatmul.mubr.bf16.gmra.mxu0 %v707
    %v812 = vpop.f32.mrf.mxu0
    %v813 = vadd.f32 0.0, %v812
    %v814 = vpop.f32.mrf.mxu0
    %v815 = vpop.f32.mrf.mxu0
    %v816 = vadd.f32 0.0, %v815
    %v817 = vpop.f32.mrf.mxu0
    %818 = vmatprep.mubr.bf16.mxu0 0
    %819 = vmatmul.mubr.bf16.gmra.mxu0 %v710
    %v820 = vpop.f32.mrf.mxu0
    %v821 = vadd.f32 0.0, %v820
    %v822 = vpop.f32.mrf.mxu0
    %v823 = vpop.f32.mrf.mxu0
    %v824 = vadd.f32 0.0, %v823
    %v825 = vpop.f32.mrf.mxu0
    %826 = vmatprep.mubr.bf16.mxu0 0
    %827 = vmatmul.mubr.bf16.gmra.mxu0 %v713
    %v828 = vpop.f32.mrf.mxu0
    %v829 = vadd.f32 0.0, %v828
    %v830 = vpop.f32.mrf.mxu0
    %v831 = vpop.f32.mrf.mxu0
    %v832 = vadd.f32 0.0, %v831
    %v833 = vpop.f32.mrf.mxu0
    %834 = vmatprep.mubr.bf16.mxu0 0
    %835 = vmatmul.mubr.bf16.gmra.mxu0 %v716
    %v836 = vpop.f32.mrf.mxu0
    %v837 = vadd.f32 0.0, %v836
    %v838 = vpop.f32.mrf.mxu0
    %v839 = vpop.f32.mrf.mxu0
    %v840 = vadd.f32 0.0, %v839
    %v841 = vpop.f32.mrf.mxu0
    %842 = vmatprep.mubr.bf16.mxu0 0
    %843 = vmatmul.mubr.bf16.gmra.mxu0 %v719
    %v844 = vpop.f32.mrf.mxu0
    %v845 = vadd.f32 0.0, %v844
    %v846 = vpop.f32.mrf.mxu0
    %v847 = vpop.f32.mrf.mxu0
    %v848 = vadd.f32 0.0, %v847
    %v849 = vpop.f32.mrf.mxu0
    %850 = vmatprep.mubr.bf16.mxu0 0
    %851 = vmatmul.mubr.bf16.gmra.mxu0 %v722
    %v852 = vpop.f32.mrf.mxu0
    %v853 = vadd.f32 0.0, %v852
    %v854 = vpop.f32.mrf.mxu0
    %v855 = vpop.f32.mrf.mxu0
    %v856 = vadd.f32 0.0, %v855
    %v857 = vpop.f32.mrf.mxu0
    %858 = vmatprep.mubr.bf16.mxu0 0
    %859 = vmatmul.mubr.bf16.gmra.mxu0 %v725
    %v860 = vpop.f32.mrf.mxu0
    %v861 = vadd.f32 0.0, %v860
    %v862 = vpop.f32.mrf.mxu0
    %v863 = vpop.f32.mrf.mxu0
    %v864 = vadd.f32 0.0, %v863
    %v865 = vpop.f32.mrf.mxu0
    %866 = vdwg.mxu0
    %v867 = vadd.f32 %v552, %v765
    %v868 = vadd.f32 %v555, %v768
    %v869 = vadd.f32 %v560, %v773
    %v870 = vadd.f32 %v563, %v776
    %v871 = vadd.f32 %v568, %v781
    %v872 = vadd.f32 %v571, %v784
    %v873 = vadd.f32 %v576, %v789
    %v874 = vadd.f32 %v579, %v792
    %v875 = vadd.f32 %v584, %v797
    %v876 = vadd.f32 %v587, %v800
    %v877 = vadd.f32 %v592, %v805
    %v878 = vadd.f32 %v595, %v808
    %v879 = vadd.f32 %v600, %v813
    %v880 = vadd.f32 %v603, %v816
    %v881 = vadd.f32 %v608, %v821
    %v882 = vadd.f32 %v611, %v824
    %v883 = vadd.f32 %v616, %v829
    %v884 = vadd.f32 %v619, %v832
    %v885 = vadd.f32 %v624, %v837
    %v886 = vadd.f32 %v627, %v840
    %v887 = vadd.f32 %v632, %v845
    %v888 = vadd.f32 %v635, %v848
    %v889 = vadd.f32 %v640, %v853
    %v890 = vadd.f32 %v643, %v856
    %v891 = vadd.f32 %v648, %v861
    %v892 = vadd.f32 %v651, %v864
    %v893 = vld [vmem:[#allocation2 + $0x4] sm:$0x8]
    %v894 = vld [vmem:[#allocation2 + $0x8] sm:$0xf]
    %v895 = vld [vmem:[#allocation2 + $0xc] sm:$0xf]
    %v896 = vld [vmem:[#allocation2 + $0x10] sm:$0xf]
    %v897 = vld [vmem:[#allocation2 + $0x14] sm:$0xf]
    %v898 = vld [vmem:[#allocation2 + $0x18] sm:$0xf]
    %v899 = vld [vmem:[#allocation2 + $0x1c] sm:$0xf]
    %v900 = vld [vmem:[#allocation2 + $0x20] sm:$0xf]
    %v901 = vld [vmem:[#allocation2 + $0x24] sm:$0xf]
    %v902 = vld [vmem:[#allocation2 + $0x28] sm:$0xf]
    %v903 = vld [vmem:[#allocation2 + $0x2c] sm:$0xf]
    %v904 = vld [vmem:[#allocation2 + $0x30] sm:$0xf]
    %v905 = vld [vmem:[#allocation2 + $0x34] sm:$0xf]
    %v906 = vld [vmem:[#allocation2 + $0x38] sm:$0xf]
    %v907 = vld [vmem:[#allocation2 + $0x3c] sm:$0xf]
    %v908 = vld [vmem:[#allocation2 + $0x40] sm:$0xf]
    %v909 = vld [vmem:[#allocation2 + $0x44] sm:$0xf]
    %v910 = vld [vmem:[#allocation2 + $0x48] sm:$0xf]
    %v911 = vld [vmem:[#allocation2 + $0x4c] sm:$0xf]
    %v912 = vld [vmem:[#allocation2 + $0x50] sm:$0xf]
    %v913 = vld [vmem:[#allocation2 + $0x54] sm:$0xf]
    %v914 = vld [vmem:[#allocation2 + $0x58] sm:$0xf]
    %v915 = vld [vmem:[#allocation2 + $0x5c] sm:$0xf]
    %v916 = vld [vmem:[#allocation2 + $0x60] sm:$0xf]
    %v917 = vld [vmem:[#allocation2 + $0x64] sm:$0xf]
    %v918 = vld [vmem:[#allocation2 + $0x68] sm:$0xf]
    %v919 = vld [vmem:[#allocation2 + $0x6c] sm:$0x7]
    %s920 = scalar_lea.vmem %s1, 6
    %v921 = vld [vmem:[%s920] sm:$0x3]
    %v949 = vunpack.c.l.b16 %v893
    %v950 = vunpack.c.l.b16 %v894
    %v951 = vunpack.c.l.b16 %v895
    %v952 = vunpack.c.l.b16 %v896
    %v953 = vunpack.c.l.b16 %v897
    %v954 = vunpack.c.l.b16 %v898
    %v955 = vunpack.c.l.b16 %v899
    %v956 = vunpack.c.l.b16 %v900
    %v957 = vunpack.c.l.b16 %v901
    %v958 = vunpack.c.l.b16 %v902
    %v959 = vunpack.c.l.b16 %v903
    %v960 = vunpack.c.l.b16 %v904
    %v961 = vunpack.c.l.b16 %v905
    %v962 = vunpack.c.l.b16 %v906
    %v963 = vunpack.c.l.b16 %v907
    %v964 = vunpack.c.l.b16 %v908
    %v965 = vunpack.c.l.b16 %v909
    %v966 = vunpack.c.l.b16 %v910
    %v967 = vunpack.c.l.b16 %v911
    %v968 = vunpack.c.l.b16 %v912
    %v969 = vunpack.c.l.b16 %v913
    %v970 = vunpack.c.l.b16 %v914
    %v971 = vunpack.c.l.b16 %v915
    %v972 = vunpack.c.l.b16 %v916
    %v973 = vunpack.c.l.b16 %v917
    %v974 = vunpack.c.l.b16 %v918
    %v975 = vunpack.c.l.b16 %v919
    %v976 = vpack.c.b16 %v950, %v949
    %v977 = vpack.c.b16 %v952, %v951
    %v978 = vpack.c.b16 %v954, %v953
    %v979 = vpack.c.b16 %v956, %v955
    %v980 = vpack.c.b16 %v958, %v957
    %v981 = vpack.c.b16 %v960, %v959
    %v982 = vpack.c.b16 %v962, %v961
    %v983 = vpack.c.b16 %v964, %v963
    %v984 = vpack.c.b16 %v966, %v965
    %v985 = vpack.c.b16 %v968, %v967
    %v986 = vpack.c.b16 %v970, %v969
    %v987 = vpack.c.b16 %v972, %v971
    %v988 = vpack.c.b16 %v974, %v973
    %v989 = vpack.c.b16 %v975, %v975
    %vm990 = vcmask 1044480
    %v991 = vrot.slane %v976, 3
    %v992 = vrot.slane %v977, 3
    %v993 = vsel %vm990, %v991, %v992
    %v994 = vrot.slane %v978, 3
    %v995 = vsel %vm990, %v992, %v994
    %v996 = vrot.slane %v979, 3
    %v997 = vsel %vm990, %v994, %v996
    %v998 = vrot.slane %v980, 3
    %v999 = vsel %vm990, %v996, %v998
    %v1000 = vrot.slane %v981, 3
    %v1001 = vsel %vm990, %v998, %v1000
    %v1002 = vrot.slane %v982, 3
    %v1003 = vsel %vm990, %v1000, %v1002
    %v1004 = vrot.slane %v983, 3
    %v1005 = vsel %vm990, %v1002, %v1004
    %v1006 = vrot.slane %v984, 3
    %v1007 = vsel %vm990, %v1004, %v1006
    %v1008 = vrot.slane %v985, 3
    %v1009 = vsel %vm990, %v1006, %v1008
    %v1010 = vrot.slane %v986, 3
    %v1011 = vsel %vm990, %v1008, %v1010
    %v1012 = vrot.slane %v987, 3
    %v1013 = vsel %vm990, %v1010, %v1012
    %v1014 = vrot.slane %v988, 3
    %v1015 = vsel %vm990, %v1012, %v1014
    %v1016 = vrot.slane %v989, 3
    %v1017 = vsel %vm990, %v1014, %v1016
    %v1019 = vsel %vm304, %v993, 0
    %v1022 = vsel %vm304, %v995, 0
    %v1025 = vsel %vm304, %v997, 0
    %v1028 = vsel %vm304, %v999, 0
    %v1031 = vsel %vm304, %v1001, 0
    %v1034 = vsel %vm304, %v1003, 0
    %v1037 = vsel %vm304, %v1005, 0
    %v1040 = vsel %vm304, %v1007, 0
    %v1043 = vsel %vm304, %v1009, 0
    %v1046 = vsel %vm304, %v1011, 0
    %v1049 = vsel %vm304, %v1013, 0
    %v1052 = vsel %vm304, %v1015, 0
    %v1055 = vsel %vm304, %v1017, 0
    %v1058 = vand.u32 %v921, %v347
    %1060 = vmatprep.subr.bf16.mxu0 0
    %1061 = vmatpush1.bf16.msra.mxu0 0
    %1062 = vmatprep.subr.bf16.mxu0 0
    %1063 = vmatpush1.bf16.msra.mxu0 0
    %1064 = vmatprep.subr.bf16.mxu0 0
    %1065 = vmatpush1.bf16.msra.mxu0 0
    %1066 = vmatprep.subr.bf16.mxu0 0
    %1067 = vmatpush1.bf16.msra.mxu0 0
    %1068 = vmatprep.subr.bf16.mxu0 0
    %1069 = vmatpush1.bf16.msra.mxu0 0
    %1070 = vmatprep.subr.bf16.mxu0 0
    %1071 = vmatpush1.bf16.msra.mxu0 0
    %1072 = vmatprep.subr.bf16.mxu0 0
    %1073 = vmatpush1.bf16.msra.mxu0 0
    %1074 = vmatprep.subr.bf16.mxu0 0
    %1075 = vmatpush1.bf16.msra.mxu0 %v1058
    %1076 = vmatprep.subr.bf16.mxu0 0
    %1077 = vmatpush2.bf16.msra.mxu0 0
    %1078 = vmatprep.subr.bf16.mxu0 0
    %1079 = vmatpush2.bf16.msra.mxu0 0
    %1080 = vmatprep.subr.bf16.mxu0 0
    %1081 = vmatpush2.bf16.msra.mxu0 0
    %1082 = vmatprep.subr.bf16.mxu0 0
    %1083 = vmatpush2.bf16.msra.mxu0 0
    %1084 = vmatprep.subr.bf16.mxu0 0
    %1085 = vmatpush2.bf16.msra.mxu0 0
    %1086 = vmatprep.subr.bf16.mxu0 0
    %1087 = vmatpush2.bf16.msra.mxu0 0
    %1088 = vmatprep.subr.bf16.mxu0 0
    %1089 = vmatpush2.bf16.msra.mxu0 0
    %1090 = vmatprep.subr.bf16.mxu0 0
    %1091 = vmatpush2.bf16.msra.mxu0 0
    %1092 = vmatprep.mubr.bf16.mxu0 0
    %1093 = vmatmul.mubr.bf16.gmra.mxu0 %v1019
    %v1094 = vpop.f32.mrf.mxu0
    %v1095 = vadd.f32 0.0, %v1094
    %v1096 = vpop.f32.mrf.mxu0
    %v1097 = vpop.f32.mrf.mxu0
    %v1098 = vadd.f32 0.0, %v1097
    %v1099 = vpop.f32.mrf.mxu0
    %1100 = vmatprep.mubr.bf16.mxu0 0
    %1101 = vmatmul.mubr.bf16.gmra.mxu0 %v1022
    %v1102 = vpop.f32.mrf.mxu0
    %v1103 = vadd.f32 0.0, %v1102
    %v1104 = vpop.f32.mrf.mxu0
    %v1105 = vpop.f32.mrf.mxu0
    %v1106 = vadd.f32 0.0, %v1105
    %v1107 = vpop.f32.mrf.mxu0
    %1108 = vmatprep.mubr.bf16.mxu0 0
    %1109 = vmatmul.mubr.bf16.gmra.mxu0 %v1025
    %v1110 = vpop.f32.mrf.mxu0
    %v1111 = vadd.f32 0.0, %v1110
    %v1112 = vpop.f32.mrf.mxu0
    %v1113 = vpop.f32.mrf.mxu0
    %v1114 = vadd.f32 0.0, %v1113
    %v1115 = vpop.f32.mrf.mxu0
    %1116 = vmatprep.mubr.bf16.mxu0 0
    %1117 = vmatmul.mubr.bf16.gmra.mxu0 %v1028
    %v1118 = vpop.f32.mrf.mxu0
    %v1119 = vadd.f32 0.0, %v1118
    %v1120 = vpop.f32.mrf.mxu0
    %v1121 = vpop.f32.mrf.mxu0
    %v1122 = vadd.f32 0.0, %v1121
    %v1123 = vpop.f32.mrf.mxu0
    %1124 = vmatprep.mubr.bf16.mxu0 0
    %1125 = vmatmul.mubr.bf16.gmra.mxu0 %v1031
    %v1126 = vpop.f32.mrf.mxu0
    %v1127 = vadd.f32 0.0, %v1126
    %v1128 = vpop.f32.mrf.mxu0
    %v1129 = vpop.f32.mrf.mxu0
    %v1130 = vadd.f32 0.0, %v1129
    %v1131 = vpop.f32.mrf.mxu0
    %1132 = vmatprep.mubr.bf16.mxu0 0
    %1133 = vmatmul.mubr.bf16.gmra.mxu0 %v1034
    %v1134 = vpop.f32.mrf.mxu0
    %v1135 = vadd.f32 0.0, %v1134
    %v1136 = vpop.f32.mrf.mxu0
    %v1137 = vpop.f32.mrf.mxu0
    %v1138 = vadd.f32 0.0, %v1137
    %v1139 = vpop.f32.mrf.mxu0
    %1140 = vmatprep.mubr.bf16.mxu0 0
    %1141 = vmatmul.mubr.bf16.gmra.mxu0 %v1037
    %v1142 = vpop.f32.mrf.mxu0
    %v1143 = vadd.f32 0.0, %v1142
    %v1144 = vpop.f32.mrf.mxu0
    %v1145 = vpop.f32.mrf.mxu0
    %v1146 = vadd.f32 0.0, %v1145
    %v1147 = vpop.f32.mrf.mxu0
    %1148 = vmatprep.mubr.bf16.mxu0 0
    %1149 = vmatmul.mubr.bf16.gmra.mxu0 %v1040
    %v1150 = vpop.f32.mrf.mxu0
    %v1151 = vadd.f32 0.0, %v1150
    %v1152 = vpop.f32.mrf.mxu0
    %v1153 = vpop.f32.mrf.mxu0
    %v1154 = vadd.f32 0.0, %v1153
    %v1155 = vpop.f32.mrf.mxu0
    %1156 = vmatprep.mubr.bf16.mxu0 0
    %1157 = vmatmul.mubr.bf16.gmra.mxu0 %v1043
    %v1158 = vpop.f32.mrf.mxu0
    %v1159 = vadd.f32 0.0, %v1158
    %v1160 = vpop.f32.mrf.mxu0
    %v1161 = vpop.f32.mrf.mxu0
    %v1162 = vadd.f32 0.0, %v1161
    %v1163 = vpop.f32.mrf.mxu0
    %1164 = vmatprep.mubr.bf16.mxu0 0
    %1165 = vmatmul.mubr.bf16.gmra.mxu0 %v1046
    %v1166 = vpop.f32.mrf.mxu0
    %v1167 = vadd.f32 0.0, %v1166
    %v1168 = vpop.f32.mrf.mxu0
    %v1169 = vpop.f32.mrf.mxu0
    %v1170 = vadd.f32 0.0, %v1169
    %v1171 = vpop.f32.mrf.mxu0
    %1172 = vmatprep.mubr.bf16.mxu0 0
    %1173 = vmatmul.mubr.bf16.gmra.mxu0 %v1049
    %v1174 = vpop.f32.mrf.mxu0
    %v1175 = vadd.f32 0.0, %v1174
    %v1176 = vpop.f32.mrf.mxu0
    %v1177 = vpop.f32.mrf.mxu0
    %v1178 = vadd.f32 0.0, %v1177
    %v1179 = vpop.f32.mrf.mxu0
    %1180 = vmatprep.mubr.bf16.mxu0 0
    %1181 = vmatmul.mubr.bf16.gmra.mxu0 %v1052
    %v1182 = vpop.f32.mrf.mxu0
    %v1183 = vadd.f32 0.0, %v1182
    %v1184 = vpop.f32.mrf.mxu0
    %v1185 = vpop.f32.mrf.mxu0
    %v1186 = vadd.f32 0.0, %v1185
    %v1187 = vpop.f32.mrf.mxu0
    %1188 = vmatprep.mubr.bf16.mxu0 0
    %1189 = vmatmul.mubr.bf16.gmra.mxu0 %v1055
    %v1190 = vpop.f32.mrf.mxu0
    %v1191 = vadd.f32 0.0, %v1190
    %v1192 = vpop.f32.mrf.mxu0
    %v1193 = vpop.f32.mrf.mxu0
    %v1194 = vadd.f32 0.0, %v1193
    %v1195 = vpop.f32.mrf.mxu0
    %1196 = vdwg.mxu0
    %v1197 = vadd.f32 %v867, %v1095
    %v1198 = vadd.f32 %v868, %v1098
    %v1199 = vadd.f32 %v869, %v1103
    %v1200 = vadd.f32 %v870, %v1106
    %v1201 = vadd.f32 %v871, %v1111
    %v1202 = vadd.f32 %v872, %v1114
    %v1203 = vadd.f32 %v873, %v1119
    %v1204 = vadd.f32 %v874, %v1122
    %v1205 = vadd.f32 %v875, %v1127
    %v1206 = vadd.f32 %v876, %v1130
    %v1207 = vadd.f32 %v877, %v1135
    %v1208 = vadd.f32 %v878, %v1138
    %v1209 = vadd.f32 %v879, %v1143
    %v1210 = vadd.f32 %v880, %v1146
    %v1211 = vadd.f32 %v881, %v1151
    %v1212 = vadd.f32 %v882, %v1154
    %v1213 = vadd.f32 %v883, %v1159
    %v1214 = vadd.f32 %v884, %v1162
    %v1215 = vadd.f32 %v885, %v1167
    %v1216 = vadd.f32 %v886, %v1170
    %v1217 = vadd.f32 %v887, %v1175
    %v1218 = vadd.f32 %v888, %v1178
    %v1219 = vadd.f32 %v889, %v1183
    %v1220 = vadd.f32 %v890, %v1186
    %v1221 = vadd.f32 %v891, %v1191
    %v1222 = vadd.f32 %v892, %v1194
    %v1223 = vld [vmem:[#allocation2 + $0x6c] sm:$0xf]
    %s1224 = scalar_lea.vmem %s1, 8
    %v1225 = vld [vmem:[%s1224] sm:$0x3]
    %v1227 = vunpack.c.l.b16 %v1223
    %v1228 = vpack.c.b16 %v1227, %v1227
    %vm1229 = vsmask.f32 4352
    %v1231 = vshrl.u32 %v976, 16
    %v1233 = vrot.slane %v1231, 3
    %v1234 = vshll.u32 %v976, 16
    %v1236 = vrot.slane %v1234, 4
    %v1237 = vor.u32 %v1233, %v1236
    %v1239 = vshrl.u32 %v977, 16
    %v1241 = vrot.slane %v1239, 3
    %v1242 = vshll.u32 %v977, 16
    %v1244 = vrot.slane %v1242, 4
    %v1245 = vor.u32 %v1241, %v1244
    %v1246 = vsel %vm1229, %v1237, %v1245
    %v1248 = vshrl.u32 %v978, 16
    %v1250 = vrot.slane %v1248, 3
    %v1251 = vshll.u32 %v978, 16
    %v1253 = vrot.slane %v1251, 4
    %v1254 = vor.u32 %v1250, %v1253
    %v1255 = vsel %vm1229, %v1245, %v1254
    %v1257 = vshrl.u32 %v979, 16
    %v1259 = vrot.slane %v1257, 3
    %v1260 = vshll.u32 %v979, 16
    %v1262 = vrot.slane %v1260, 4
    %v1263 = vor.u32 %v1259, %v1262
    %v1264 = vsel %vm1229, %v1254, %v1263
    %v1266 = vshrl.u32 %v980, 16
    %v1268 = vrot.slane %v1266, 3
    %v1269 = vshll.u32 %v980, 16
    %v1271 = vrot.slane %v1269, 4
    %v1272 = vor.u32 %v1268, %v1271
    %v1273 = vsel %vm1229, %v1263, %v1272
    %v1275 = vshrl.u32 %v981, 16
    %v1277 = vrot.slane %v1275, 3
    %v1278 = vshll.u32 %v981, 16
    %v1280 = vrot.slane %v1278, 4
    %v1281 = vor.u32 %v1277, %v1280
    %v1282 = vsel %vm1229, %v1272, %v1281
    %v1284 = vshrl.u32 %v982, 16
    %v1286 = vrot.slane %v1284, 3
    %v1287 = vshll.u32 %v982, 16
    %v1289 = vrot.slane %v1287, 4
    %v1290 = vor.u32 %v1286, %v1289
    %v1291 = vsel %vm1229, %v1281, %v1290
    %v1293 = vshrl.u32 %v983, 16
    %v1295 = vrot.slane %v1293, 3
    %v1296 = vshll.u32 %v983, 16
    %v1298 = vrot.slane %v1296, 4
    %v1299 = vor.u32 %v1295, %v1298
    %v1300 = vsel %vm1229, %v1290, %v1299
    %v1302 = vshrl.u32 %v984, 16
    %v1304 = vrot.slane %v1302, 3
    %v1305 = vshll.u32 %v984, 16
    %v1307 = vrot.slane %v1305, 4
    %v1308 = vor.u32 %v1304, %v1307
    %v1309 = vsel %vm1229, %v1299, %v1308
    %v1311 = vshrl.u32 %v985, 16
    %v1313 = vrot.slane %v1311, 3
    %v1314 = vshll.u32 %v985, 16
    %v1316 = vrot.slane %v1314, 4
    %v1317 = vor.u32 %v1313, %v1316
    %v1318 = vsel %vm1229, %v1308, %v1317
    %v1320 = vshrl.u32 %v986, 16
    %v1322 = vrot.slane %v1320, 3
    %v1323 = vshll.u32 %v986, 16
    %v1325 = vrot.slane %v1323, 4
    %v1326 = vor.u32 %v1322, %v1325
    %v1327 = vsel %vm1229, %v1317, %v1326
    %v1329 = vshrl.u32 %v987, 16
    %v1331 = vrot.slane %v1329, 3
    %v1332 = vshll.u32 %v987, 16
    %v1334 = vrot.slane %v1332, 4
    %v1335 = vor.u32 %v1331, %v1334
    %v1336 = vsel %vm1229, %v1326, %v1335
    %v1338 = vshrl.u32 %v988, 16
    %v1340 = vrot.slane %v1338, 3
    %v1341 = vshll.u32 %v988, 16
    %v1343 = vrot.slane %v1341, 4
    %v1344 = vor.u32 %v1340, %v1343
    %v1345 = vsel %vm1229, %v1335, %v1344
    %v1347 = vshrl.u32 %v1228, 16
    %v1349 = vrot.slane %v1347, 3
    %v1350 = vshll.u32 %v1228, 16
    %v1352 = vrot.slane %v1350, 4
    %v1353 = vor.u32 %v1349, %v1352
    %v1354 = vsel %vm1229, %v1344, %v1353
    %v1356 = vsel %vm304, %v1246, 0
    %v1359 = vsel %vm304, %v1255, 0
    %v1362 = vsel %vm304, %v1264, 0
    %v1365 = vsel %vm304, %v1273, 0
    %v1368 = vsel %vm304, %v1282, 0
    %v1371 = vsel %vm304, %v1291, 0
    %v1374 = vsel %vm304, %v1300, 0
    %v1377 = vsel %vm304, %v1309, 0
    %v1380 = vsel %vm304, %v1318, 0
    %v1383 = vsel %vm304, %v1327, 0
    %v1386 = vsel %vm304, %v1336, 0
    %v1389 = vsel %vm304, %v1345, 0
    %v1392 = vsel %vm304, %v1354, 0
    %v1395 = vand.u32 %v1225, %v347
    %1397 = vmatprep.subr.bf16.mxu0 0
    %1398 = vmatpush1.bf16.msra.mxu0 0
    %1399 = vmatprep.subr.bf16.mxu0 0
    %1400 = vmatpush1.bf16.msra.mxu0 0
    %1401 = vmatprep.subr.bf16.mxu0 0
    %1402 = vmatpush1.bf16.msra.mxu0 0
    %1403 = vmatprep.subr.bf16.mxu0 0
    %1404 = vmatpush1.bf16.msra.mxu0 0
    %1405 = vmatprep.subr.bf16.mxu0 0
    %1406 = vmatpush1.bf16.msra.mxu0 0
    %1407 = vmatprep.subr.bf16.mxu0 0
    %1408 = vmatpush1.bf16.msra.mxu0 0
    %1409 = vmatprep.subr.bf16.mxu0 0
    %1410 = vmatpush1.bf16.msra.mxu0 0
    %1411 = vmatprep.subr.bf16.mxu0 0
    %1412 = vmatpush1.bf16.msra.mxu0 %v1395
    %1413 = vmatprep.subr.bf16.mxu0 0
    %1414 = vmatpush2.bf16.msra.mxu0 0
    %1415 = vmatprep.subr.bf16.mxu0 0
    %1416 = vmatpush2.bf16.msra.mxu0 0
    %1417 = vmatprep.subr.bf16.mxu0 0
    %1418 = vmatpush2.bf16.msra.mxu0 0
    %1419 = vmatprep.subr.bf16.mxu0 0
    %1420 = vmatpush2.bf16.msra.mxu0 0
    %1421 = vmatprep.subr.bf16.mxu0 0
    %1422 = vmatpush2.bf16.msra.mxu0 0
    %1423 = vmatprep.subr.bf16.mxu0 0
    %1424 = vmatpush2.bf16.msra.mxu0 0
    %1425 = vmatprep.subr.bf16.mxu0 0
    %1426 = vmatpush2.bf16.msra.mxu0 0
    %1427 = vmatprep.subr.bf16.mxu0 0
    %1428 = vmatpush2.bf16.msra.mxu0 0
    %1429 = vmatprep.mubr.bf16.mxu0 0
    %1430 = vmatmul.mubr.bf16.gmra.mxu0 %v1356
    %v1431 = vpop.f32.mrf.mxu0
    %v1432 = vadd.f32 0.0, %v1431
    %v1433 = vpop.f32.mrf.mxu0
    %v1434 = vpop.f32.mrf.mxu0
    %v1435 = vadd.f32 0.0, %v1434
    %v1436 = vpop.f32.mrf.mxu0
    %1437 = vmatprep.mubr.bf16.mxu0 0
    %1438 = vmatmul.mubr.bf16.gmra.mxu0 %v1359
    %v1439 = vpop.f32.mrf.mxu0
    %v1440 = vadd.f32 0.0, %v1439
    %v1441 = vpop.f32.mrf.mxu0
    %v1442 = vpop.f32.mrf.mxu0
    %v1443 = vadd.f32 0.0, %v1442
    %v1444 = vpop.f32.mrf.mxu0
    %1445 = vmatprep.mubr.bf16.mxu0 0
    %1446 = vmatmul.mubr.bf16.gmra.mxu0 %v1362
    %v1447 = vpop.f32.mrf.mxu0
    %v1448 = vadd.f32 0.0, %v1447
    %v1449 = vpop.f32.mrf.mxu0
    %v1450 = vpop.f32.mrf.mxu0
    %v1451 = vadd.f32 0.0, %v1450
    %v1452 = vpop.f32.mrf.mxu0
    %1453 = vmatprep.mubr.bf16.mxu0 0
    %1454 = vmatmul.mubr.bf16.gmra.mxu0 %v1365
    %v1455 = vpop.f32.mrf.mxu0
    %v1456 = vadd.f32 0.0, %v1455
    %v1457 = vpop.f32.mrf.mxu0
    %v1458 = vpop.f32.mrf.mxu0
    %v1459 = vadd.f32 0.0, %v1458
    %v1460 = vpop.f32.mrf.mxu0
    %1461 = vmatprep.mubr.bf16.mxu0 0
    %1462 = vmatmul.mubr.bf16.gmra.mxu0 %v1368
    %v1463 = vpop.f32.mrf.mxu0
    %v1464 = vadd.f32 0.0, %v1463
    %v1465 = vpop.f32.mrf.mxu0
    %v1466 = vpop.f32.mrf.mxu0
    %v1467 = vadd.f32 0.0, %v1466
    %v1468 = vpop.f32.mrf.mxu0
    %1469 = vmatprep.mubr.bf16.mxu0 0
    %1470 = vmatmul.mubr.bf16.gmra.mxu0 %v1371
    %v1471 = vpop.f32.mrf.mxu0
    %v1472 = vadd.f32 0.0, %v1471
    %v1473 = vpop.f32.mrf.mxu0
    %v1474 = vpop.f32.mrf.mxu0
    %v1475 = vadd.f32 0.0, %v1474
    %v1476 = vpop.f32.mrf.mxu0
    %1477 = vmatprep.mubr.bf16.mxu0 0
    %1478 = vmatmul.mubr.bf16.gmra.mxu0 %v1374
    %v1479 = vpop.f32.mrf.mxu0
    %v1480 = vadd.f32 0.0, %v1479
    %v1481 = vpop.f32.mrf.mxu0
    %v1482 = vpop.f32.mrf.mxu0
    %v1483 = vadd.f32 0.0, %v1482
    %v1484 = vpop.f32.mrf.mxu0
    %1485 = vmatprep.mubr.bf16.mxu0 0
    %1486 = vmatmul.mubr.bf16.gmra.mxu0 %v1377
    %v1487 = vpop.f32.mrf.mxu0
    %v1488 = vadd.f32 0.0, %v1487
    %v1489 = vpop.f32.mrf.mxu0
    %v1490 = vpop.f32.mrf.mxu0
    %v1491 = vadd.f32 0.0, %v1490
    %v1492 = vpop.f32.mrf.mxu0
    %1493 = vmatprep.mubr.bf16.mxu0 0
    %1494 = vmatmul.mubr.bf16.gmra.mxu0 %v1380
    %v1495 = vpop.f32.mrf.mxu0
    %v1496 = vadd.f32 0.0, %v1495
    %v1497 = vpop.f32.mrf.mxu0
    %v1498 = vpop.f32.mrf.mxu0
    %v1499 = vadd.f32 0.0, %v1498
    %v1500 = vpop.f32.mrf.mxu0
    %1501 = vmatprep.mubr.bf16.mxu0 0
    %1502 = vmatmul.mubr.bf16.gmra.mxu0 %v1383
    %v1503 = vpop.f32.mrf.mxu0
    %v1504 = vadd.f32 0.0, %v1503
    %v1505 = vpop.f32.mrf.mxu0
    %v1506 = vpop.f32.mrf.mxu0
    %v1507 = vadd.f32 0.0, %v1506
    %v1508 = vpop.f32.mrf.mxu0
    %1509 = vmatprep.mubr.bf16.mxu0 0
    %1510 = vmatmul.mubr.bf16.gmra.mxu0 %v1386
    %v1511 = vpop.f32.mrf.mxu0
    %v1512 = vadd.f32 0.0, %v1511
    %v1513 = vpop.f32.mrf.mxu0
    %v1514 = vpop.f32.mrf.mxu0
    %v1515 = vadd.f32 0.0, %v1514
    %v1516 = vpop.f32.mrf.mxu0
    %1517 = vmatprep.mubr.bf16.mxu0 0
    %1518 = vmatmul.mubr.bf16.gmra.mxu0 %v1389
    %v1519 = vpop.f32.mrf.mxu0
    %v1520 = vadd.f32 0.0, %v1519
    %v1521 = vpop.f32.mrf.mxu0
    %v1522 = vpop.f32.mrf.mxu0
    %v1523 = vadd.f32 0.0, %v1522
    %v1524 = vpop.f32.mrf.mxu0
    %1525 = vmatprep.mubr.bf16.mxu0 0
    %1526 = vmatmul.mubr.bf16.gmra.mxu0 %v1392
    %v1527 = vpop.f32.mrf.mxu0
    %v1528 = vadd.f32 0.0, %v1527
    %v1529 = vpop.f32.mrf.mxu0
    %v1530 = vpop.f32.mrf.mxu0
    %v1531 = vadd.f32 0.0, %v1530
    %v1532 = vpop.f32.mrf.mxu0
    %1533 = vdwg.mxu0
    %v1534 = vadd.f32 %v1197, %v1432
    %v1535 = vadd.f32 %v1198, %v1435
    %v1536 = vadd.f32 %v1199, %v1440
    %v1537 = vadd.f32 %v1200, %v1443
    %v1538 = vadd.f32 %v1201, %v1448
    %v1539 = vadd.f32 %v1202, %v1451
    %v1540 = vadd.f32 %v1203, %v1456
    %v1541 = vadd.f32 %v1204, %v1459
    %v1542 = vadd.f32 %v1205, %v1464
    %v1543 = vadd.f32 %v1206, %v1467
    %v1544 = vadd.f32 %v1207, %v1472
    %v1545 = vadd.f32 %v1208, %v1475
    %v1546 = vadd.f32 %v1209, %v1480
    %v1547 = vadd.f32 %v1210, %v1483
    %v1548 = vadd.f32 %v1211, %v1488
    %v1549 = vadd.f32 %v1212, %v1491
    %v1550 = vadd.f32 %v1213, %v1496
    %v1551 = vadd.f32 %v1214, %v1499
    %v1552 = vadd.f32 %v1215, %v1504
    %v1553 = vadd.f32 %v1216, %v1507
    %v1554 = vadd.f32 %v1217, %v1512
    %v1555 = vadd.f32 %v1218, %v1515
    %v1556 = vadd.f32 %v1219, %v1520
    %v1557 = vadd.f32 %v1220, %v1523
    %v1558 = vadd.f32 %v1221, %v1528
    %v1559 = vadd.f32 %v1222, %v1531
    %s1560 = scalar_lea.vmem %s1, 10
    %v1561 = vld [vmem:[%s1560] sm:$0x3]
    %v1562 = vpack.c.b16 %v951, %v950
    %v1563 = vpack.c.b16 %v953, %v952
    %v1564 = vpack.c.b16 %v955, %v954
    %v1565 = vpack.c.b16 %v957, %v956
    %v1566 = vpack.c.b16 %v959, %v958
    %v1567 = vpack.c.b16 %v961, %v960
    %v1568 = vpack.c.b16 %v963, %v962
    %v1569 = vpack.c.b16 %v965, %v964
    %v1570 = vpack.c.b16 %v967, %v966
    %v1571 = vpack.c.b16 %v969, %v968
    %v1572 = vpack.c.b16 %v971, %v970
    %v1573 = vpack.c.b16 %v973, %v972
    %v1574 = vpack.c.b16 %v1227, %v974
    %v1576 = vsel %vm304, %v1562, 0
    %v1579 = vsel %vm304, %v1563, 0
    %v1582 = vsel %vm304, %v1564, 0
    %v1585 = vsel %vm304, %v1565, 0
    %v1588 = vsel %vm304, %v1566, 0
    %v1591 = vsel %vm304, %v1567, 0
    %v1594 = vsel %vm304, %v1568, 0
    %v1597 = vsel %vm304, %v1569, 0
    %v1600 = vsel %vm304, %v1570, 0
    %v1603 = vsel %vm304, %v1571, 0
    %v1606 = vsel %vm304, %v1572, 0
    %v1609 = vsel %vm304, %v1573, 0
    %v1612 = vsel %vm304, %v1574, 0
    %v1615 = vand.u32 %v1561, %v347
    %1617 = vmatprep.subr.bf16.mxu0 0
    %1618 = vmatpush1.bf16.msra.mxu0 0
    %1619 = vmatprep.subr.bf16.mxu0 0
    %1620 = vmatpush1.bf16.msra.mxu0 0
    %1621 = vmatprep.subr.bf16.mxu0 0
    %1622 = vmatpush1.bf16.msra.mxu0 0
    %1623 = vmatprep.subr.bf16.mxu0 0
    %1624 = vmatpush1.bf16.msra.mxu0 0
    %1625 = vmatprep.subr.bf16.mxu0 0
    %1626 = vmatpush1.bf16.msra.mxu0 0
    %1627 = vmatprep.subr.bf16.mxu0 0
    %1628 = vmatpush1.bf16.msra.mxu0 0
    %1629 = vmatprep.subr.bf16.mxu0 0
    %1630 = vmatpush1.bf16.msra.mxu0 0
    %1631 = vmatprep.subr.bf16.mxu0 0
    %1632 = vmatpush1.bf16.msra.mxu0 %v1615
    %1633 = vmatprep.subr.bf16.mxu0 0
    %1634 = vmatpush2.bf16.msra.mxu0 0
    %1635 = vmatprep.subr.bf16.mxu0 0
    %1636 = vmatpush2.bf16.msra.mxu0 0
    %1637 = vmatprep.subr.bf16.mxu0 0
    %1638 = vmatpush2.bf16.msra.mxu0 0
    %1639 = vmatprep.subr.bf16.mxu0 0
    %1640 = vmatpush2.bf16.msra.mxu0 0
    %1641 = vmatprep.subr.bf16.mxu0 0
    %1642 = vmatpush2.bf16.msra.mxu0 0
    %1643 = vmatprep.subr.bf16.mxu0 0
    %1644 = vmatpush2.bf16.msra.mxu0 0
    %1645 = vmatprep.subr.bf16.mxu0 0
    %1646 = vmatpush2.bf16.msra.mxu0 0
    %1647 = vmatprep.subr.bf16.mxu0 0
    %1648 = vmatpush2.bf16.msra.mxu0 0
    %1649 = vmatprep.mubr.bf16.mxu0 0
    %1650 = vmatmul.mubr.bf16.gmra.mxu0 %v1576
    %v1651 = vpop.f32.mrf.mxu0
    %v1652 = vadd.f32 0.0, %v1651
    %v1653 = vpop.f32.mrf.mxu0
    %v1654 = vpop.f32.mrf.mxu0
    %v1655 = vadd.f32 0.0, %v1654
    %v1656 = vpop.f32.mrf.mxu0
    %1657 = vmatprep.mubr.bf16.mxu0 0
    %1658 = vmatmul.mubr.bf16.gmra.mxu0 %v1579
    %v1659 = vpop.f32.mrf.mxu0
    %v1660 = vadd.f32 0.0, %v1659
    %v1661 = vpop.f32.mrf.mxu0
    %v1662 = vpop.f32.mrf.mxu0
    %v1663 = vadd.f32 0.0, %v1662
    %v1664 = vpop.f32.mrf.mxu0
    %1665 = vmatprep.mubr.bf16.mxu0 0
    %1666 = vmatmul.mubr.bf16.gmra.mxu0 %v1582
    %v1667 = vpop.f32.mrf.mxu0
    %v1668 = vadd.f32 0.0, %v1667
    %v1669 = vpop.f32.mrf.mxu0
    %v1670 = vpop.f32.mrf.mxu0
    %v1671 = vadd.f32 0.0, %v1670
    %v1672 = vpop.f32.mrf.mxu0
    %1673 = vmatprep.mubr.bf16.mxu0 0
    %1674 = vmatmul.mubr.bf16.gmra.mxu0 %v1585
    %v1675 = vpop.f32.mrf.mxu0
    %v1676 = vadd.f32 0.0, %v1675
    %v1677 = vpop.f32.mrf.mxu0
    %v1678 = vpop.f32.mrf.mxu0
    %v1679 = vadd.f32 0.0, %v1678
    %v1680 = vpop.f32.mrf.mxu0
    %1681 = vmatprep.mubr.bf16.mxu0 0
    %1682 = vmatmul.mubr.bf16.gmra.mxu0 %v1588
    %v1683 = vpop.f32.mrf.mxu0
    %v1684 = vadd.f32 0.0, %v1683
    %v1685 = vpop.f32.mrf.mxu0
    %v1686 = vpop.f32.mrf.mxu0
    %v1687 = vadd.f32 0.0, %v1686
    %v1688 = vpop.f32.mrf.mxu0
    %1689 = vmatprep.mubr.bf16.mxu0 0
    %1690 = vmatmul.mubr.bf16.gmra.mxu0 %v1591
    %v1691 = vpop.f32.mrf.mxu0
    %v1692 = vadd.f32 0.0, %v1691
    %v1693 = vpop.f32.mrf.mxu0
    %v1694 = vpop.f32.mrf.mxu0
    %v1695 = vadd.f32 0.0, %v1694
    %v1696 = vpop.f32.mrf.mxu0
    %1697 = vmatprep.mubr.bf16.mxu0 0
    %1698 = vmatmul.mubr.bf16.gmra.mxu0 %v1594
    %v1699 = vpop.f32.mrf.mxu0
    %v1700 = vadd.f32 0.0, %v1699
    %v1701 = vpop.f32.mrf.mxu0
    %v1702 = vpop.f32.mrf.mxu0
    %v1703 = vadd.f32 0.0, %v1702
    %v1704 = vpop.f32.mrf.mxu0
    %1705 = vmatprep.mubr.bf16.mxu0 0
    %1706 = vmatmul.mubr.bf16.gmra.mxu0 %v1597
    %v1707 = vpop.f32.mrf.mxu0
    %v1708 = vadd.f32 0.0, %v1707
    %v1709 = vpop.f32.mrf.mxu0
    %v1710 = vpop.f32.mrf.mxu0
    %v1711 = vadd.f32 0.0, %v1710
    %v1712 = vpop.f32.mrf.mxu0
    %1713 = vmatprep.mubr.bf16.mxu0 0
    %1714 = vmatmul.mubr.bf16.gmra.mxu0 %v1600
    %v1715 = vpop.f32.mrf.mxu0
    %v1716 = vadd.f32 0.0, %v1715
    %v1717 = vpop.f32.mrf.mxu0
    %v1718 = vpop.f32.mrf.mxu0
    %v1719 = vadd.f32 0.0, %v1718
    %v1720 = vpop.f32.mrf.mxu0
    %1721 = vmatprep.mubr.bf16.mxu0 0
    %1722 = vmatmul.mubr.bf16.gmra.mxu0 %v1603
    %v1723 = vpop.f32.mrf.mxu0
    %v1724 = vadd.f32 0.0, %v1723
    %v1725 = vpop.f32.mrf.mxu0
    %v1726 = vpop.f32.mrf.mxu0
    %v1727 = vadd.f32 0.0, %v1726
    %v1728 = vpop.f32.mrf.mxu0
    %1729 = vmatprep.mubr.bf16.mxu0 0
    %1730 = vmatmul.mubr.bf16.gmra.mxu0 %v1606
    %v1731 = vpop.f32.mrf.mxu0
    %v1732 = vadd.f32 0.0, %v1731
    %v1733 = vpop.f32.mrf.mxu0
    %v1734 = vpop.f32.mrf.mxu0
    %v1735 = vadd.f32 0.0, %v1734
    %v1736 = vpop.f32.mrf.mxu0
    %1737 = vmatprep.mubr.bf16.mxu0 0
    %1738 = vmatmul.mubr.bf16.gmra.mxu0 %v1609
    %v1739 = vpop.f32.mrf.mxu0
    %v1740 = vadd.f32 0.0, %v1739
    %v1741 = vpop.f32.mrf.mxu0
    %v1742 = vpop.f32.mrf.mxu0
    %v1743 = vadd.f32 0.0, %v1742
    %v1744 = vpop.f32.mrf.mxu0
    %1745 = vmatprep.mubr.bf16.mxu0 0
    %1746 = vmatmul.mubr.bf16.gmra.mxu0 %v1612
    %v1747 = vpop.f32.mrf.mxu0
    %v1748 = vadd.f32 0.0, %v1747
    %v1749 = vpop.f32.mrf.mxu0
    %v1750 = vpop.f32.mrf.mxu0
    %v1751 = vadd.f32 0.0, %v1750
    %v1752 = vpop.f32.mrf.mxu0
    %1753 = vdwg.mxu0
    %v1754 = vadd.f32 %v1534, %v1652
    %v1755 = vadd.f32 %v1535, %v1655
    %v1756 = vadd.f32 %v1536, %v1660
    %v1757 = vadd.f32 %v1537, %v1663
    %v1758 = vadd.f32 %v1538, %v1668
    %v1759 = vadd.f32 %v1539, %v1671
    %v1760 = vadd.f32 %v1540, %v1676
    %v1761 = vadd.f32 %v1541, %v1679
    %v1762 = vadd.f32 %v1542, %v1684
    %v1763 = vadd.f32 %v1543, %v1687
    %v1764 = vadd.f32 %v1544, %v1692
    %v1765 = vadd.f32 %v1545, %v1695
    %v1766 = vadd.f32 %v1546, %v1700
    %v1767 = vadd.f32 %v1547, %v1703
    %v1768 = vadd.f32 %v1548, %v1708
    %v1769 = vadd.f32 %v1549, %v1711
    %v1770 = vadd.f32 %v1550, %v1716
    %v1771 = vadd.f32 %v1551, %v1719
    %v1772 = vadd.f32 %v1552, %v1724
    %v1773 = vadd.f32 %v1553, %v1727
    %v1774 = vadd.f32 %v1554, %v1732
    %v1775 = vadd.f32 %v1555, %v1735
    %v1776 = vadd.f32 %v1556, %v1740
    %v1777 = vadd.f32 %v1557, %v1743
    %v1778 = vadd.f32 %v1558, %v1748
    %v1779 = vadd.f32 %v1559, %v1751
    %v1780 = vld [vmem:[#allocation2 + $0xc] sm:$0xc]
    %v1781 = vld [vmem:[#allocation2 + $0x10] sm:$0xf]
    %v1782 = vld [vmem:[#allocation2 + $0x14] sm:$0xf]
    %v1783 = vld [vmem:[#allocation2 + $0x18] sm:$0xf]
    %v1784 = vld [vmem:[#allocation2 + $0x1c] sm:$0xf]
    %v1785 = vld [vmem:[#allocation2 + $0x20] sm:$0xf]
    %v1786 = vld [vmem:[#allocation2 + $0x24] sm:$0xf]
    %v1787 = vld [vmem:[#allocation2 + $0x28] sm:$0xf]
    %v1788 = vld [vmem:[#allocation2 + $0x2c] sm:$0xf]
    %v1789 = vld [vmem:[#allocation2 + $0x30] sm:$0xf]
    %v1790 = vld [vmem:[#allocation2 + $0x34] sm:$0xf]
    %v1791 = vld [vmem:[#allocation2 + $0x38] sm:$0xf]
    %v1792 = vld [vmem:[#allocation2 + $0x3c] sm:$0xf]
    %v1793 = vld [vmem:[#allocation2 + $0x40] sm:$0xf]
    %v1794 = vld [vmem:[#allocation2 + $0x44] sm:$0xf]
    %v1795 = vld [vmem:[#allocation2 + $0x48] sm:$0xf]
    %v1796 = vld [vmem:[#allocation2 + $0x4c] sm:$0xf]
    %v1797 = vld [vmem:[#allocation2 + $0x50] sm:$0xf]
    %v1798 = vld [vmem:[#allocation2 + $0x54] sm:$0xf]
    %v1799 = vld [vmem:[#allocation2 + $0x58] sm:$0xf]
    %v1800 = vld [vmem:[#allocation2 + $0x5c] sm:$0xf]
    %v1801 = vld [vmem:[#allocation2 + $0x60] sm:$0xf]
    %v1802 = vld [vmem:[#allocation2 + $0x64] sm:$0xf]
    %v1803 = vld [vmem:[#allocation2 + $0x68] sm:$0xf]
    %v1804 = vld [vmem:[#allocation2 + $0x6c] sm:$0xf]
    %v1805 = vld [vmem:[#allocation2 + $0x70] sm:$0xf]
    %v1806 = vld [vmem:[#allocation2 + $0x74] sm:$0x3]
    %s1807 = scalar_lea.vmem %s1, 12
    %v1808 = vld [vmem:[%s1807] sm:$0x3]
    %v1836 = vunpack.c.l.b16 %v1780
    %v1837 = vunpack.c.l.b16 %v1781
    %v1838 = vunpack.c.l.b16 %v1782
    %v1839 = vunpack.c.l.b16 %v1783
    %v1840 = vunpack.c.l.b16 %v1784
    %v1841 = vunpack.c.l.b16 %v1785
    %v1842 = vunpack.c.l.b16 %v1786
    %v1843 = vunpack.c.l.b16 %v1787
    %v1844 = vunpack.c.l.b16 %v1788
    %v1845 = vunpack.c.l.b16 %v1789
    %v1846 = vunpack.c.l.b16 %v1790
    %v1847 = vunpack.c.l.b16 %v1791
    %v1848 = vunpack.c.l.b16 %v1792
    %v1849 = vunpack.c.l.b16 %v1793
    %v1850 = vunpack.c.l.b16 %v1794
    %v1851 = vunpack.c.l.b16 %v1795
    %v1852 = vunpack.c.l.b16 %v1796
    %v1853 = vunpack.c.l.b16 %v1797
    %v1854 = vunpack.c.l.b16 %v1798
    %v1855 = vunpack.c.l.b16 %v1799
    %v1856 = vunpack.c.l.b16 %v1800
    %v1857 = vunpack.c.l.b16 %v1801
    %v1858 = vunpack.c.l.b16 %v1802
    %v1859 = vunpack.c.l.b16 %v1803
    %v1860 = vunpack.c.l.b16 %v1804
    %v1861 = vunpack.c.l.b16 %v1805
    %v1862 = vunpack.c.l.b16 %v1806
    %v1863 = vpack.c.b16 %v1837, %v1836
    %v1864 = vpack.c.b16 %v1839, %v1838
    %v1865 = vpack.c.b16 %v1841, %v1840
    %v1866 = vpack.c.b16 %v1843, %v1842
    %v1867 = vpack.c.b16 %v1845, %v1844
    %v1868 = vpack.c.b16 %v1847, %v1846
    %v1869 = vpack.c.b16 %v1849, %v1848
    %v1870 = vpack.c.b16 %v1851, %v1850
    %v1871 = vpack.c.b16 %v1853, %v1852
    %v1872 = vpack.c.b16 %v1855, %v1854
    %v1873 = vpack.c.b16 %v1857, %v1856
    %v1874 = vpack.c.b16 %v1859, %v1858
    %v1875 = vpack.c.b16 %v1861, %v1860
    %v1876 = vpack.c.b16 %v1862, %v1862
    %vm1877 = vcmask 1045504
    %v1878 = vrot.slane %v1863, 2
    %v1879 = vrot.slane %v1864, 2
    %v1880 = vsel %vm1877, %v1878, %v1879
    %v1881 = vrot.slane %v1865, 2
    %v1882 = vsel %vm1877, %v1879, %v1881
    %v1883 = vrot.slane %v1866, 2
    %v1884 = vsel %vm1877, %v1881, %v1883
    %v1885 = vrot.slane %v1867, 2
    %v1886 = vsel %vm1877, %v1883, %v1885
    %v1887 = vrot.slane %v1868, 2
    %v1888 = vsel %vm1877, %v1885, %v1887
    %v1889 = vrot.slane %v1869, 2
    %v1890 = vsel %vm1877, %v1887, %v1889
    %v1891 = vrot.slane %v1870, 2
    %v1892 = vsel %vm1877, %v1889, %v1891
    %v1893 = vrot.slane %v1871, 2
    %v1894 = vsel %vm1877, %v1891, %v1893
    %v1895 = vrot.slane %v1872, 2
    %v1896 = vsel %vm1877, %v1893, %v1895
    %v1897 = vrot.slane %v1873, 2
    %v1898 = vsel %vm1877, %v1895, %v1897
    %v1899 = vrot.slane %v1874, 2
    %v1900 = vsel %vm1877, %v1897, %v1899
    %v1901 = vrot.slane %v1875, 2
    %v1902 = vsel %vm1877, %v1899, %v1901
    %v1903 = vrot.slane %v1876, 2
    %v1904 = vsel %vm1877, %v1901, %v1903
    %v1906 = vsel %vm304, %v1880, 0
    %v1909 = vsel %vm304, %v1882, 0
    %v1912 = vsel %vm304, %v1884, 0
    %v1915 = vsel %vm304, %v1886, 0
    %v1918 = vsel %vm304, %v1888, 0
    %v1921 = vsel %vm304, %v1890, 0
    %v1924 = vsel %vm304, %v1892, 0
    %v1927 = vsel %vm304, %v1894, 0
    %v1930 = vsel %vm304, %v1896, 0
    %v1933 = vsel %vm304, %v1898, 0
    %v1936 = vsel %vm304, %v1900, 0
    %v1939 = vsel %vm304, %v1902, 0
    %v1942 = vsel %vm304, %v1904, 0
    %v1945 = vand.u32 %v1808, %v347
    %1947 = vmatprep.subr.bf16.mxu0 0
    %1948 = vmatpush1.bf16.msra.mxu0 0
    %1949 = vmatprep.subr.bf16.mxu0 0
    %1950 = vmatpush1.bf16.msra.mxu0 0
    %1951 = vmatprep.subr.bf16.mxu0 0
    %1952 = vmatpush1.bf16.msra.mxu0 0
    %1953 = vmatprep.subr.bf16.mxu0 0
    %1954 = vmatpush1.bf16.msra.mxu0 0
    %1955 = vmatprep.subr.bf16.mxu0 0
    %1956 = vmatpush1.bf16.msra.mxu0 0
    %1957 = vmatprep.subr.bf16.mxu0 0
    %1958 = vmatpush1.bf16.msra.mxu0 0
    %1959 = vmatprep.subr.bf16.mxu0 0
    %1960 = vmatpush1.bf16.msra.mxu0 0
    %1961 = vmatprep.subr.bf16.mxu0 0
    %1962 = vmatpush1.bf16.msra.mxu0 %v1945
    %1963 = vmatprep.subr.bf16.mxu0 0
    %1964 = vmatpush2.bf16.msra.mxu0 0
    %1965 = vmatprep.subr.bf16.mxu0 0
    %1966 = vmatpush2.bf16.msra.mxu0 0
    %1967 = vmatprep.subr.bf16.mxu0 0
    %1968 = vmatpush2.bf16.msra.mxu0 0
    %1969 = vmatprep.subr.bf16.mxu0 0
    %1970 = vmatpush2.bf16.msra.mxu0 0
    %1971 = vmatprep.subr.bf16.mxu0 0
    %1972 = vmatpush2.bf16.msra.mxu0 0
    %1973 = vmatprep.subr.bf16.mxu0 0
    %1974 = vmatpush2.bf16.msra.mxu0 0
    %1975 = vmatprep.subr.bf16.mxu0 0
    %1976 = vmatpush2.bf16.msra.mxu0 0
    %1977 = vmatprep.subr.bf16.mxu0 0
    %1978 = vmatpush2.bf16.msra.mxu0 0
    %1979 = vmatprep.mubr.bf16.mxu0 0
    %1980 = vmatmul.mubr.bf16.gmra.mxu0 %v1906
    %v1981 = vpop.f32.mrf.mxu0
    %v1982 = vadd.f32 0.0, %v1981
    %v1983 = vpop.f32.mrf.mxu0
    %v1984 = vpop.f32.mrf.mxu0
    %v1985 = vadd.f32 0.0, %v1984
    %v1986 = vpop.f32.mrf.mxu0
    %1987 = vmatprep.mubr.bf16.mxu0 0
    %1988 = vmatmul.mubr.bf16.gmra.mxu0 %v1909
    %v1989 = vpop.f32.mrf.mxu0
    %v1990 = vadd.f32 0.0, %v1989
    %v1991 = vpop.f32.mrf.mxu0
    %v1992 = vpop.f32.mrf.mxu0
    %v1993 = vadd.f32 0.0, %v1992
    %v1994 = vpop.f32.mrf.mxu0
    %1995 = vmatprep.mubr.bf16.mxu0 0
    %1996 = vmatmul.mubr.bf16.gmra.mxu0 %v1912
    %v1997 = vpop.f32.mrf.mxu0
    %v1998 = vadd.f32 0.0, %v1997
    %v1999 = vpop.f32.mrf.mxu0
    %v2000 = vpop.f32.mrf.mxu0
    %v2001 = vadd.f32 0.0, %v2000
    %v2002 = vpop.f32.mrf.mxu0
    %2003 = vmatprep.mubr.bf16.mxu0 0
    %2004 = vmatmul.mubr.bf16.gmra.mxu0 %v1915
    %v2005 = vpop.f32.mrf.mxu0
    %v2006 = vadd.f32 0.0, %v2005
    %v2007 = vpop.f32.mrf.mxu0
    %v2008 = vpop.f32.mrf.mxu0
    %v2009 = vadd.f32 0.0, %v2008
    %v2010 = vpop.f32.mrf.mxu0
    %2011 = vmatprep.mubr.bf16.mxu0 0
    %2012 = vmatmul.mubr.bf16.gmra.mxu0 %v1918
    %v2013 = vpop.f32.mrf.mxu0
    %v2014 = vadd.f32 0.0, %v2013
    %v2015 = vpop.f32.mrf.mxu0
    %v2016 = vpop.f32.mrf.mxu0
    %v2017 = vadd.f32 0.0, %v2016
    %v2018 = vpop.f32.mrf.mxu0
    %2019 = vmatprep.mubr.bf16.mxu0 0
    %2020 = vmatmul.mubr.bf16.gmra.mxu0 %v1921
    %v2021 = vpop.f32.mrf.mxu0
    %v2022 = vadd.f32 0.0, %v2021
    %v2023 = vpop.f32.mrf.mxu0
    %v2024 = vpop.f32.mrf.mxu0
    %v2025 = vadd.f32 0.0, %v2024
    %v2026 = vpop.f32.mrf.mxu0
    %2027 = vmatprep.mubr.bf16.mxu0 0
    %2028 = vmatmul.mubr.bf16.gmra.mxu0 %v1924
    %v2029 = vpop.f32.mrf.mxu0
    %v2030 = vadd.f32 0.0, %v2029
    %v2031 = vpop.f32.mrf.mxu0
    %v2032 = vpop.f32.mrf.mxu0
    %v2033 = vadd.f32 0.0, %v2032
    %v2034 = vpop.f32.mrf.mxu0
    %2035 = vmatprep.mubr.bf16.mxu0 0
    %2036 = vmatmul.mubr.bf16.gmra.mxu0 %v1927
    %v2037 = vpop.f32.mrf.mxu0
    %v2038 = vadd.f32 0.0, %v2037
    %v2039 = vpop.f32.mrf.mxu0
    %v2040 = vpop.f32.mrf.mxu0
    %v2041 = vadd.f32 0.0, %v2040
    %v2042 = vpop.f32.mrf.mxu0
    %2043 = vmatprep.mubr.bf16.mxu0 0
    %2044 = vmatmul.mubr.bf16.gmra.mxu0 %v1930
    %v2045 = vpop.f32.mrf.mxu0
    %v2046 = vadd.f32 0.0, %v2045
    %v2047 = vpop.f32.mrf.mxu0
    %v2048 = vpop.f32.mrf.mxu0
    %v2049 = vadd.f32 0.0, %v2048
    %v2050 = vpop.f32.mrf.mxu0
    %2051 = vmatprep.mubr.bf16.mxu0 0
    %2052 = vmatmul.mubr.bf16.gmra.mxu0 %v1933
    %v2053 = vpop.f32.mrf.mxu0
    %v2054 = vadd.f32 0.0, %v2053
    %v2055 = vpop.f32.mrf.mxu0
    %v2056 = vpop.f32.mrf.mxu0
    %v2057 = vadd.f32 0.0, %v2056
    %v2058 = vpop.f32.mrf.mxu0
    %2059 = vmatprep.mubr.bf16.mxu0 0
    %2060 = vmatmul.mubr.bf16.gmra.mxu0 %v1936
    %v2061 = vpop.f32.mrf.mxu0
    %v2062 = vadd.f32 0.0, %v2061
    %v2063 = vpop.f32.mrf.mxu0
    %v2064 = vpop.f32.mrf.mxu0
    %v2065 = vadd.f32 0.0, %v2064
    %v2066 = vpop.f32.mrf.mxu0
    %2067 = vmatprep.mubr.bf16.mxu0 0
    %2068 = vmatmul.mubr.bf16.gmra.mxu0 %v1939
    %v2069 = vpop.f32.mrf.mxu0
    %v2070 = vadd.f32 0.0, %v2069
    %v2071 = vpop.f32.mrf.mxu0
    %v2072 = vpop.f32.mrf.mxu0
    %v2073 = vadd.f32 0.0, %v2072
    %v2074 = vpop.f32.mrf.mxu0
    %2075 = vmatprep.mubr.bf16.mxu0 0
    %2076 = vmatmul.mubr.bf16.gmra.mxu0 %v1942
    %v2077 = vpop.f32.mrf.mxu0
    %v2078 = vadd.f32 0.0, %v2077
    %v2079 = vpop.f32.mrf.mxu0
    %v2080 = vpop.f32.mrf.mxu0
    %v2081 = vadd.f32 0.0, %v2080
    %v2082 = vpop.f32.mrf.mxu0
    %2083 = vdwg.mxu0
    %v2084 = vadd.f32 %v1754, %v1982
    %v2085 = vadd.f32 %v1755, %v1985
    %v2086 = vadd.f32 %v1756, %v1990
    %v2087 = vadd.f32 %v1757, %v1993
    %v2088 = vadd.f32 %v1758, %v1998
    %v2089 = vadd.f32 %v1759, %v2001
    %v2090 = vadd.f32 %v1760, %v2006
    %v2091 = vadd.f32 %v1761, %v2009
    %v2092 = vadd.f32 %v1762, %v2014
    %v2093 = vadd.f32 %v1763, %v2017
    %v2094 = vadd.f32 %v1764, %v2022
    %v2095 = vadd.f32 %v1765, %v2025
    %v2096 = vadd.f32 %v1766, %v2030
    %v2097 = vadd.f32 %v1767, %v2033
    %v2098 = vadd.f32 %v1768, %v2038
    %v2099 = vadd.f32 %v1769, %v2041
    %v2100 = vadd.f32 %v1770, %v2046
    %v2101 = vadd.f32 %v1771, %v2049
    %v2102 = vadd.f32 %v1772, %v2054
    %v2103 = vadd.f32 %v1773, %v2057
    %v2104 = vadd.f32 %v1774, %v2062
    %v2105 = vadd.f32 %v1775, %v2065
    %v2106 = vadd.f32 %v1776, %v2070
    %v2107 = vadd.f32 %v1777, %v2073
    %v2108 = vadd.f32 %v1778, %v2078
    %v2109 = vadd.f32 %v1779, %v2081
    %v2110 = vld [vmem:[#allocation2 + $0x74] sm:$0x7]
    %s2111 = scalar_lea.vmem %s1, 14
    %v2112 = vld [vmem:[%s2111] sm:$0x3]
    %v2114 = vunpack.c.l.b16 %v2110
    %v2115 = vpack.c.b16 %v2114, %v2114
    %vm2116 = vsmask.f32 5376
    %v2118 = vshrl.u32 %v1863, 16
    %v2120 = vrot.slane %v2118, 2
    %v2121 = vshll.u32 %v1863, 16
    %v2123 = vrot.slane %v2121, 3
    %v2124 = vor.u32 %v2120, %v2123
    %v2126 = vshrl.u32 %v1864, 16
    %v2128 = vrot.slane %v2126, 2
    %v2129 = vshll.u32 %v1864, 16
    %v2131 = vrot.slane %v2129, 3
    %v2132 = vor.u32 %v2128, %v2131
    %v2133 = vsel %vm2116, %v2124, %v2132
    %v2135 = vshrl.u32 %v1865, 16
    %v2137 = vrot.slane %v2135, 2
    %v2138 = vshll.u32 %v1865, 16
    %v2140 = vrot.slane %v2138, 3
    %v2141 = vor.u32 %v2137, %v2140
    %v2142 = vsel %vm2116, %v2132, %v2141
    %v2144 = vshrl.u32 %v1866, 16
    %v2146 = vrot.slane %v2144, 2
    %v2147 = vshll.u32 %v1866, 16
    %v2149 = vrot.slane %v2147, 3
    %v2150 = vor.u32 %v2146, %v2149
    %v2151 = vsel %vm2116, %v2141, %v2150
    %v2153 = vshrl.u32 %v1867, 16
    %v2155 = vrot.slane %v2153, 2
    %v2156 = vshll.u32 %v1867, 16
    %v2158 = vrot.slane %v2156, 3
    %v2159 = vor.u32 %v2155, %v2158
    %v2160 = vsel %vm2116, %v2150, %v2159
    %v2162 = vshrl.u32 %v1868, 16
    %v2164 = vrot.slane %v2162, 2
    %v2165 = vshll.u32 %v1868, 16
    %v2167 = vrot.slane %v2165, 3
    %v2168 = vor.u32 %v2164, %v2167
    %v2169 = vsel %vm2116, %v2159, %v2168
    %v2171 = vshrl.u32 %v1869, 16
    %v2173 = vrot.slane %v2171, 2
    %v2174 = vshll.u32 %v1869, 16
    %v2176 = vrot.slane %v2174, 3
    %v2177 = vor.u32 %v2173, %v2176
    %v2178 = vsel %vm2116, %v2168, %v2177
    %v2180 = vshrl.u32 %v1870, 16
    %v2182 = vrot.slane %v2180, 2
    %v2183 = vshll.u32 %v1870, 16
    %v2185 = vrot.slane %v2183, 3
    %v2186 = vor.u32 %v2182, %v2185
    %v2187 = vsel %vm2116, %v2177, %v2186
    %v2189 = vshrl.u32 %v1871, 16
    %v2191 = vrot.slane %v2189, 2
    %v2192 = vshll.u32 %v1871, 16
    %v2194 = vrot.slane %v2192, 3
    %v2195 = vor.u32 %v2191, %v2194
    %v2196 = vsel %vm2116, %v2186, %v2195
    %v2198 = vshrl.u32 %v1872, 16
    %v2200 = vrot.slane %v2198, 2
    %v2201 = vshll.u32 %v1872, 16
    %v2203 = vrot.slane %v2201, 3
    %v2204 = vor.u32 %v2200, %v2203
    %v2205 = vsel %vm2116, %v2195, %v2204
    %v2207 = vshrl.u32 %v1873, 16
    %v2209 = vrot.slane %v2207, 2
    %v2210 = vshll.u32 %v1873, 16
    %v2212 = vrot.slane %v2210, 3
    %v2213 = vor.u32 %v2209, %v2212
    %v2214 = vsel %vm2116, %v2204, %v2213
    %v2216 = vshrl.u32 %v1874, 16
    %v2218 = vrot.slane %v2216, 2
    %v2219 = vshll.u32 %v1874, 16
    %v2221 = vrot.slane %v2219, 3
    %v2222 = vor.u32 %v2218, %v2221
    %v2223 = vsel %vm2116, %v2213, %v2222
    %v2225 = vshrl.u32 %v1875, 16
    %v2227 = vrot.slane %v2225, 2
    %v2228 = vshll.u32 %v1875, 16
    %v2230 = vrot.slane %v2228, 3
    %v2231 = vor.u32 %v2227, %v2230
    %v2232 = vsel %vm2116, %v2222, %v2231
    %v2234 = vshrl.u32 %v2115, 16
    %v2236 = vrot.slane %v2234, 2
    %v2237 = vshll.u32 %v2115, 16
    %v2239 = vrot.slane %v2237, 3
    %v2240 = vor.u32 %v2236, %v2239
    %v2241 = vsel %vm2116, %v2231, %v2240
    %v2243 = vsel %vm304, %v2133, 0
    %v2246 = vsel %vm304, %v2142, 0
    %v2249 = vsel %vm304, %v2151, 0
    %v2252 = vsel %vm304, %v2160, 0
    %v2255 = vsel %vm304, %v2169, 0
    %v2258 = vsel %vm304, %v2178, 0
    %v2261 = vsel %vm304, %v2187, 0
    %v2264 = vsel %vm304, %v2196, 0
    %v2267 = vsel %vm304, %v2205, 0
    %v2270 = vsel %vm304, %v2214, 0
    %v2273 = vsel %vm304, %v2223, 0
    %v2276 = vsel %vm304, %v2232, 0
    %v2279 = vsel %vm304, %v2241, 0
    %v2282 = vand.u32 %v2112, %v347
    %2284 = vmatprep.subr.bf16.mxu0 0
    %2285 = vmatpush1.bf16.msra.mxu0 0
    %2286 = vmatprep.subr.bf16.mxu0 0
    %2287 = vmatpush1.bf16.msra.mxu0 0
    %2288 = vmatprep.subr.bf16.mxu0 0
    %2289 = vmatpush1.bf16.msra.mxu0 0
    %2290 = vmatprep.subr.bf16.mxu0 0
    %2291 = vmatpush1.bf16.msra.mxu0 0
    %2292 = vmatprep.subr.bf16.mxu0 0
    %2293 = vmatpush1.bf16.msra.mxu0 0
    %2294 = vmatprep.subr.bf16.mxu0 0
    %2295 = vmatpush1.bf16.msra.mxu0 0
    %2296 = vmatprep.subr.bf16.mxu0 0
    %2297 = vmatpush1.bf16.msra.mxu0 0
    %2298 = vmatprep.subr.bf16.mxu0 0
    %2299 = vmatpush1.bf16.msra.mxu0 %v2282
    %2300 = vmatprep.subr.bf16.mxu0 0
    %2301 = vmatpush2.bf16.msra.mxu0 0
    %2302 = vmatprep.subr.bf16.mxu0 0
    %2303 = vmatpush2.bf16.msra.mxu0 0
    %2304 = vmatprep.subr.bf16.mxu0 0
    %2305 = vmatpush2.bf16.msra.mxu0 0
    %2306 = vmatprep.subr.bf16.mxu0 0
    %2307 = vmatpush2.bf16.msra.mxu0 0
    %2308 = vmatprep.subr.bf16.mxu0 0
    %2309 = vmatpush2.bf16.msra.mxu0 0
    %2310 = vmatprep.subr.bf16.mxu0 0
    %2311 = vmatpush2.bf16.msra.mxu0 0
    %2312 = vmatprep.subr.bf16.mxu0 0
    %2313 = vmatpush2.bf16.msra.mxu0 0
    %2314 = vmatprep.subr.bf16.mxu0 0
    %2315 = vmatpush2.bf16.msra.mxu0 0
    %2316 = vmatprep.mubr.bf16.mxu0 0
    %2317 = vmatmul.mubr.bf16.gmra.mxu0 %v2243
    %v2318 = vpop.f32.mrf.mxu0
    %v2319 = vadd.f32 0.0, %v2318
    %v2320 = vpop.f32.mrf.mxu0
    %v2321 = vpop.f32.mrf.mxu0
    %v2322 = vadd.f32 0.0, %v2321
    %v2323 = vpop.f32.mrf.mxu0
    %2324 = vmatprep.mubr.bf16.mxu0 0
    %2325 = vmatmul.mubr.bf16.gmra.mxu0 %v2246
    %v2326 = vpop.f32.mrf.mxu0
    %v2327 = vadd.f32 0.0, %v2326
    %v2328 = vpop.f32.mrf.mxu0
    %v2329 = vpop.f32.mrf.mxu0
    %v2330 = vadd.f32 0.0, %v2329
    %v2331 = vpop.f32.mrf.mxu0
    %2332 = vmatprep.mubr.bf16.mxu0 0
    %2333 = vmatmul.mubr.bf16.gmra.mxu0 %v2249
    %v2334 = vpop.f32.mrf.mxu0
    %v2335 = vadd.f32 0.0, %v2334
    %v2336 = vpop.f32.mrf.mxu0
    %v2337 = vpop.f32.mrf.mxu0
    %v2338 = vadd.f32 0.0, %v2337
    %v2339 = vpop.f32.mrf.mxu0
    %2340 = vmatprep.mubr.bf16.mxu0 0
    %2341 = vmatmul.mubr.bf16.gmra.mxu0 %v2252
    %v2342 = vpop.f32.mrf.mxu0
    %v2343 = vadd.f32 0.0, %v2342
    %v2344 = vpop.f32.mrf.mxu0
    %v2345 = vpop.f32.mrf.mxu0
    %v2346 = vadd.f32 0.0, %v2345
    %v2347 = vpop.f32.mrf.mxu0
    %2348 = vmatprep.mubr.bf16.mxu0 0
    %2349 = vmatmul.mubr.bf16.gmra.mxu0 %v2255
    %v2350 = vpop.f32.mrf.mxu0
    %v2351 = vadd.f32 0.0, %v2350
    %v2352 = vpop.f32.mrf.mxu0
    %v2353 = vpop.f32.mrf.mxu0
    %v2354 = vadd.f32 0.0, %v2353
    %v2355 = vpop.f32.mrf.mxu0
    %2356 = vmatprep.mubr.bf16.mxu0 0
    %2357 = vmatmul.mubr.bf16.gmra.mxu0 %v2258
    %v2358 = vpop.f32.mrf.mxu0
    %v2359 = vadd.f32 0.0, %v2358
    %v2360 = vpop.f32.mrf.mxu0
    %v2361 = vpop.f32.mrf.mxu0
    %v2362 = vadd.f32 0.0, %v2361
    %v2363 = vpop.f32.mrf.mxu0
    %2364 = vmatprep.mubr.bf16.mxu0 0
    %2365 = vmatmul.mubr.bf16.gmra.mxu0 %v2261
    %v2366 = vpop.f32.mrf.mxu0
    %v2367 = vadd.f32 0.0, %v2366
    %v2368 = vpop.f32.mrf.mxu0
    %v2369 = vpop.f32.mrf.mxu0
    %v2370 = vadd.f32 0.0, %v2369
    %v2371 = vpop.f32.mrf.mxu0
    %2372 = vmatprep.mubr.bf16.mxu0 0
    %2373 = vmatmul.mubr.bf16.gmra.mxu0 %v2264
    %v2374 = vpop.f32.mrf.mxu0
    %v2375 = vadd.f32 0.0, %v2374
    %v2376 = vpop.f32.mrf.mxu0
    %v2377 = vpop.f32.mrf.mxu0
    %v2378 = vadd.f32 0.0, %v2377
    %v2379 = vpop.f32.mrf.mxu0
    %2380 = vmatprep.mubr.bf16.mxu0 0
    %2381 = vmatmul.mubr.bf16.gmra.mxu0 %v2267
    %v2382 = vpop.f32.mrf.mxu0
    %v2383 = vadd.f32 0.0, %v2382
    %v2384 = vpop.f32.mrf.mxu0
    %v2385 = vpop.f32.mrf.mxu0
    %v2386 = vadd.f32 0.0, %v2385
    %v2387 = vpop.f32.mrf.mxu0
    %2388 = vmatprep.mubr.bf16.mxu0 0
    %2389 = vmatmul.mubr.bf16.gmra.mxu0 %v2270
    %v2390 = vpop.f32.mrf.mxu0
    %v2391 = vadd.f32 0.0, %v2390
    %v2392 = vpop.f32.mrf.mxu0
    %v2393 = vpop.f32.mrf.mxu0
    %v2394 = vadd.f32 0.0, %v2393
    %v2395 = vpop.f32.mrf.mxu0
    %2396 = vmatprep.mubr.bf16.mxu0 0
    %2397 = vmatmul.mubr.bf16.gmra.mxu0 %v2273
    %v2398 = vpop.f32.mrf.mxu0
    %v2399 = vadd.f32 0.0, %v2398
    %v2400 = vpop.f32.mrf.mxu0
    %v2401 = vpop.f32.mrf.mxu0
    %v2402 = vadd.f32 0.0, %v2401
    %v2403 = vpop.f32.mrf.mxu0
    %2404 = vmatprep.mubr.bf16.mxu0 0
    %2405 = vmatmul.mubr.bf16.gmra.mxu0 %v2276
    %v2406 = vpop.f32.mrf.mxu0
    %v2407 = vadd.f32 0.0, %v2406
    %v2408 = vpop.f32.mrf.mxu0
    %v2409 = vpop.f32.mrf.mxu0
    %v2410 = vadd.f32 0.0, %v2409
    %v2411 = vpop.f32.mrf.mxu0
    %2412 = vmatprep.mubr.bf16.mxu0 0
    %2413 = vmatmul.mubr.bf16.gmra.mxu0 %v2279
    %v2414 = vpop.f32.mrf.mxu0
    %v2415 = vadd.f32 0.0, %v2414
    %v2416 = vpop.f32.mrf.mxu0
    %v2417 = vpop.f32.mrf.mxu0
    %v2418 = vadd.f32 0.0, %v2417
    %v2419 = vpop.f32.mrf.mxu0
    %2420 = vdwg.mxu0
    %v2421 = vadd.f32 %v2084, %v2319
    %v2422 = vadd.f32 %v2085, %v2322
    %v2423 = vadd.f32 %v2086, %v2327
    %v2424 = vadd.f32 %v2087, %v2330
    %v2425 = vadd.f32 %v2088, %v2335
    %v2426 = vadd.f32 %v2089, %v2338
    %v2427 = vadd.f32 %v2090, %v2343
    %v2428 = vadd.f32 %v2091, %v2346
    %v2429 = vadd.f32 %v2092, %v2351
    %v2430 = vadd.f32 %v2093, %v2354
    %v2431 = vadd.f32 %v2094, %v2359
    %v2432 = vadd.f32 %v2095, %v2362
    %v2433 = vadd.f32 %v2096, %v2367
    %v2434 = vadd.f32 %v2097, %v2370
    %v2435 = vadd.f32 %v2098, %v2375
    %v2436 = vadd.f32 %v2099, %v2378
    %v2437 = vadd.f32 %v2100, %v2383
    %v2438 = vadd.f32 %v2101, %v2386
    %v2439 = vadd.f32 %v2102, %v2391
    %v2440 = vadd.f32 %v2103, %v2394
    %v2441 = vadd.f32 %v2104, %v2399
    %v2442 = vadd.f32 %v2105, %v2402
    %v2443 = vadd.f32 %v2106, %v2407
    %v2444 = vadd.f32 %v2107, %v2410
    %v2445 = vadd.f32 %v2108, %v2415
    %v2446 = vadd.f32 %v2109, %v2418
    %v2447 = vld [vmem:[#allocation2 + $0xc] sm:$0x8]
    %s2448 = scalar_lea.vmem %s1, 16
    %v2449 = vld [vmem:[%s2448] sm:$0x3]
    %v2451 = vunpack.c.l.b16 %v2447
    %v2452 = vpack.c.b16 %v1837, %v2451
    %v2453 = vrot.slane %v2452, 3
    %v2454 = vrot.slane %v1864, 3
    %v2455 = vsel %vm990, %v2453, %v2454
    %v2456 = vrot.slane %v1865, 3
    %v2457 = vsel %vm990, %v2454, %v2456
    %v2458 = vrot.slane %v1866, 3
    %v2459 = vsel %vm990, %v2456, %v2458
    %v2460 = vrot.slane %v1867, 3
    %v2461 = vsel %vm990, %v2458, %v2460
    %v2462 = vrot.slane %v1868, 3
    %v2463 = vsel %vm990, %v2460, %v2462
    %v2464 = vrot.slane %v1869, 3
    %v2465 = vsel %vm990, %v2462, %v2464
    %v2466 = vrot.slane %v1870, 3
    %v2467 = vsel %vm990, %v2464, %v2466
    %v2468 = vrot.slane %v1871, 3
    %v2469 = vsel %vm990, %v2466, %v2468
    %v2470 = vrot.slane %v1872, 3
    %v2471 = vsel %vm990, %v2468, %v2470
    %v2472 = vrot.slane %v1873, 3
    %v2473 = vsel %vm990, %v2470, %v2472
    %v2474 = vrot.slane %v1874, 3
    %v2475 = vsel %vm990, %v2472, %v2474
    %v2476 = vrot.slane %v1875, 3
    %v2477 = vsel %vm990, %v2474, %v2476
    %v2478 = vrot.slane %v2115, 3
    %v2479 = vsel %vm990, %v2476, %v2478
    %v2481 = vsel %vm304, %v2455, 0
    %v2484 = vsel %vm304, %v2457, 0
    %v2487 = vsel %vm304, %v2459, 0
    %v2490 = vsel %vm304, %v2461, 0
    %v2493 = vsel %vm304, %v2463, 0
    %v2496 = vsel %vm304, %v2465, 0
    %v2499 = vsel %vm304, %v2467, 0
    %v2502 = vsel %vm304, %v2469, 0
    %v2505 = vsel %vm304, %v2471, 0
    %v2508 = vsel %vm304, %v2473, 0
    %v2511 = vsel %vm304, %v2475, 0
    %v2514 = vsel %vm304, %v2477, 0
    %v2517 = vsel %vm304, %v2479, 0
    %v2520 = vand.u32 %v2449, %v347
    %2522 = vmatprep.subr.bf16.mxu0 0
    %2523 = vmatpush1.bf16.msra.mxu0 0
    %2524 = vmatprep.subr.bf16.mxu0 0
    %2525 = vmatpush1.bf16.msra.mxu0 0
    %2526 = vmatprep.subr.bf16.mxu0 0
    %2527 = vmatpush1.bf16.msra.mxu0 0
    %2528 = vmatprep.subr.bf16.mxu0 0
    %2529 = vmatpush1.bf16.msra.mxu0 0
    %2530 = vmatprep.subr.bf16.mxu0 0
    %2531 = vmatpush1.bf16.msra.mxu0 0
    %2532 = vmatprep.subr.bf16.mxu0 0
    %2533 = vmatpush1.bf16.msra.mxu0 0
    %2534 = vmatprep.subr.bf16.mxu0 0
    %2535 = vmatpush1.bf16.msra.mxu0 0
    %2536 = vmatprep.subr.bf16.mxu0 0
    %2537 = vmatpush1.bf16.msra.mxu0 %v2520
    %2538 = vmatprep.subr.bf16.mxu0 0
    %2539 = vmatpush2.bf16.msra.mxu0 0
    %2540 = vmatprep.subr.bf16.mxu0 0
    %2541 = vmatpush2.bf16.msra.mxu0 0
    %2542 = vmatprep.subr.bf16.mxu0 0
    %2543 = vmatpush2.bf16.msra.mxu0 0
    %2544 = vmatprep.subr.bf16.mxu0 0
    %2545 = vmatpush2.bf16.msra.mxu0 0
    %2546 = vmatprep.subr.bf16.mxu0 0
    %2547 = vmatpush2.bf16.msra.mxu0 0
    %2548 = vmatprep.subr.bf16.mxu0 0
    %2549 = vmatpush2.bf16.msra.mxu0 0
    %2550 = vmatprep.subr.bf16.mxu0 0
    %2551 = vmatpush2.bf16.msra.mxu0 0
    %2552 = vmatprep.subr.bf16.mxu0 0
    %2553 = vmatpush2.bf16.msra.mxu0 0
    %2554 = vmatprep.mubr.bf16.mxu0 0
    %2555 = vmatmul.mubr.bf16.gmra.mxu0 %v2481
    %v2556 = vpop.f32.mrf.mxu0
    %v2557 = vadd.f32 0.0, %v2556
    %v2558 = vpop.f32.mrf.mxu0
    %v2559 = vpop.f32.mrf.mxu0
    %v2560 = vadd.f32 0.0, %v2559
    %v2561 = vpop.f32.mrf.mxu0
    %2562 = vmatprep.mubr.bf16.mxu0 0
    %2563 = vmatmul.mubr.bf16.gmra.mxu0 %v2484
    %v2564 = vpop.f32.mrf.mxu0
    %v2565 = vadd.f32 0.0, %v2564
    %v2566 = vpop.f32.mrf.mxu0
    %v2567 = vpop.f32.mrf.mxu0
    %v2568 = vadd.f32 0.0, %v2567
    %v2569 = vpop.f32.mrf.mxu0
    %2570 = vmatprep.mubr.bf16.mxu0 0
    %2571 = vmatmul.mubr.bf16.gmra.mxu0 %v2487
    %v2572 = vpop.f32.mrf.mxu0
    %v2573 = vadd.f32 0.0, %v2572
    %v2574 = vpop.f32.mrf.mxu0
    %v2575 = vpop.f32.mrf.mxu0
    %v2576 = vadd.f32 0.0, %v2575
    %v2577 = vpop.f32.mrf.mxu0
    %2578 = vmatprep.mubr.bf16.mxu0 0
    %2579 = vmatmul.mubr.bf16.gmra.mxu0 %v2490
    %v2580 = vpop.f32.mrf.mxu0
    %v2581 = vadd.f32 0.0, %v2580
    %v2582 = vpop.f32.mrf.mxu0
    %v2583 = vpop.f32.mrf.mxu0
    %v2584 = vadd.f32 0.0, %v2583
    %v2585 = vpop.f32.mrf.mxu0
    %2586 = vmatprep.mubr.bf16.mxu0 0
    %2587 = vmatmul.mubr.bf16.gmra.mxu0 %v2493
    %v2588 = vpop.f32.mrf.mxu0
    %v2589 = vadd.f32 0.0, %v2588
    %v2590 = vpop.f32.mrf.mxu0
    %v2591 = vpop.f32.mrf.mxu0
    %v2592 = vadd.f32 0.0, %v2591
    %v2593 = vpop.f32.mrf.mxu0
    %2594 = vmatprep.mubr.bf16.mxu0 0
    %2595 = vmatmul.mubr.bf16.gmra.mxu0 %v2496
    %v2596 = vpop.f32.mrf.mxu0
    %v2597 = vadd.f32 0.0, %v2596
    %v2598 = vpop.f32.mrf.mxu0
    %v2599 = vpop.f32.mrf.mxu0
    %v2600 = vadd.f32 0.0, %v2599
    %v2601 = vpop.f32.mrf.mxu0
    %2602 = vmatprep.mubr.bf16.mxu0 0
    %2603 = vmatmul.mubr.bf16.gmra.mxu0 %v2499
    %v2604 = vpop.f32.mrf.mxu0
    %v2605 = vadd.f32 0.0, %v2604
    %v2606 = vpop.f32.mrf.mxu0
    %v2607 = vpop.f32.mrf.mxu0
    %v2608 = vadd.f32 0.0, %v2607
    %v2609 = vpop.f32.mrf.mxu0
    %2610 = vmatprep.mubr.bf16.mxu0 0
    %2611 = vmatmul.mubr.bf16.gmra.mxu0 %v2502
    %v2612 = vpop.f32.mrf.mxu0
    %v2613 = vadd.f32 0.0, %v2612
    %v2614 = vpop.f32.mrf.mxu0
    %v2615 = vpop.f32.mrf.mxu0
    %v2616 = vadd.f32 0.0, %v2615
    %v2617 = vpop.f32.mrf.mxu0
    %2618 = vmatprep.mubr.bf16.mxu0 0
    %2619 = vmatmul.mubr.bf16.gmra.mxu0 %v2505
    %v2620 = vpop.f32.mrf.mxu0
    %v2621 = vadd.f32 0.0, %v2620
    %v2622 = vpop.f32.mrf.mxu0
    %v2623 = vpop.f32.mrf.mxu0
    %v2624 = vadd.f32 0.0, %v2623
    %v2625 = vpop.f32.mrf.mxu0
    %2626 = vmatprep.mubr.bf16.mxu0 0
    %2627 = vmatmul.mubr.bf16.gmra.mxu0 %v2508
    %v2628 = vpop.f32.mrf.mxu0
    %v2629 = vadd.f32 0.0, %v2628
    %v2630 = vpop.f32.mrf.mxu0
    %v2631 = vpop.f32.mrf.mxu0
    %v2632 = vadd.f32 0.0, %v2631
    %v2633 = vpop.f32.mrf.mxu0
    %2634 = vmatprep.mubr.bf16.mxu0 0
    %2635 = vmatmul.mubr.bf16.gmra.mxu0 %v2511
    %v2636 = vpop.f32.mrf.mxu0
    %v2637 = vadd.f32 0.0, %v2636
    %v2638 = vpop.f32.mrf.mxu0
    %v2639 = vpop.f32.mrf.mxu0
    %v2640 = vadd.f32 0.0, %v2639
    %v2641 = vpop.f32.mrf.mxu0
    %2642 = vmatprep.mubr.bf16.mxu0 0
    %2643 = vmatmul.mubr.bf16.gmra.mxu0 %v2514
    %v2644 = vpop.f32.mrf.mxu0
    %v2645 = vadd.f32 0.0, %v2644
    %v2646 = vpop.f32.mrf.mxu0
    %v2647 = vpop.f32.mrf.mxu0
    %v2648 = vadd.f32 0.0, %v2647
    %v2649 = vpop.f32.mrf.mxu0
    %2650 = vmatprep.mubr.bf16.mxu0 0
    %2651 = vmatmul.mubr.bf16.gmra.mxu0 %v2517
    %v2652 = vpop.f32.mrf.mxu0
    %v2653 = vadd.f32 0.0, %v2652
    %v2654 = vpop.f32.mrf.mxu0
    %v2655 = vpop.f32.mrf.mxu0
    %v2656 = vadd.f32 0.0, %v2655
    %v2657 = vpop.f32.mrf.mxu0
    %2658 = vdwg.mxu0
    %v2659 = vadd.f32 %v2421, %v2557
    %v2660 = vadd.f32 %v2422, %v2560
    %v2661 = vadd.f32 %v2423, %v2565
    %v2662 = vadd.f32 %v2424, %v2568
    %v2663 = vadd.f32 %v2425, %v2573
    %v2664 = vadd.f32 %v2426, %v2576
    %v2665 = vadd.f32 %v2427, %v2581
    %v2666 = vadd.f32 %v2428, %v2584
    %v2667 = vadd.f32 %v2429, %v2589
    %v2668 = vadd.f32 %v2430, %v2592
    %v2669 = vadd.f32 %v2431, %v2597
    %v2670 = vadd.f32 %v2432, %v2600
    %v2671 = vadd.f32 %v2433, %v2605
    %v2672 = vadd.f32 %v2434, %v2608
    %v2673 = vadd.f32 %v2435, %v2613
    %v2674 = vadd.f32 %v2436, %v2616
    %v2675 = vadd.f32 %v2437, %v2621
    %v2676 = vadd.f32 %v2438, %v2624
    %v2677 = vadd.f32 %v2439, %v2629
    %v2678 = vadd.f32 %v2440, %v2632
    %v2679 = vadd.f32 %v2441, %v2637
    %v2680 = vadd.f32 %v2442, %v2640
    %v2681 = vadd.f32 %v2443, %v2645
    %v2682 = vadd.f32 %v2444, %v2648
    %v2683 = vadd.f32 %v2445, %v2653
    %v2684 = vadd.f32 %v2446, %v2656
    %v2685 = vld [vmem:[%s2] sm:$0x1]
    %v2687 = vlaneseq
    %v2688 = vshrl.u32 %v2687, 7
    %v2689 = vsub.s32 0, %v2688
    %v2690 = vrot.slane %v2685, %v2689
    %v2692 = vadd.f32 %v2659, %v2690
    %v2693 = vadd.f32 %v2660, %v2690
    %v2694 = vadd.f32 %v2661, %v2690
    %v2695 = vadd.f32 %v2662, %v2690
    %v2696 = vadd.f32 %v2663, %v2690
    %v2697 = vadd.f32 %v2664, %v2690
    %v2698 = vadd.f32 %v2665, %v2690
    %v2699 = vadd.f32 %v2666, %v2690
    %v2700 = vadd.f32 %v2667, %v2690
    %v2701 = vadd.f32 %v2668, %v2690
    %v2702 = vadd.f32 %v2669, %v2690
    %v2703 = vadd.f32 %v2670, %v2690
    %v2704 = vadd.f32 %v2671, %v2690
    %v2705 = vadd.f32 %v2672, %v2690
    %v2706 = vadd.f32 %v2673, %v2690
    %v2707 = vadd.f32 %v2674, %v2690
    %v2708 = vadd.f32 %v2675, %v2690
    %v2709 = vadd.f32 %v2676, %v2690
    %v2710 = vadd.f32 %v2677, %v2690
    %v2711 = vadd.f32 %v2678, %v2690
    %v2712 = vadd.f32 %v2679, %v2690
    %v2713 = vadd.f32 %v2680, %v2690
    %v2714 = vadd.f32 %v2681, %v2690
    %v2715 = vadd.f32 %v2682, %v2690
    %v2716 = vadd.f32 %v2683, %v2690
    %v2717 = vadd.f32 %v2684, %v2690
    %v2718 = vmax.f32 %v2692, 0.0
    %v2719 = vmax.f32 %v2693, 0.0
    %v2720 = vmax.f32 %v2694, 0.0
    %v2721 = vmax.f32 %v2695, 0.0
    %v2722 = vmax.f32 %v2696, 0.0
    %v2723 = vmax.f32 %v2697, 0.0
    %v2724 = vmax.f32 %v2698, 0.0
    %v2725 = vmax.f32 %v2699, 0.0
    %v2726 = vmax.f32 %v2700, 0.0
    %v2727 = vmax.f32 %v2701, 0.0
    %v2728 = vmax.f32 %v2702, 0.0
    %v2729 = vmax.f32 %v2703, 0.0
    %v2730 = vmax.f32 %v2704, 0.0
    %v2731 = vmax.f32 %v2705, 0.0
    %v2732 = vmax.f32 %v2706, 0.0
    %v2733 = vmax.f32 %v2707, 0.0
    %v2734 = vmax.f32 %v2708, 0.0
    %v2735 = vmax.f32 %v2709, 0.0
    %v2736 = vmax.f32 %v2710, 0.0
    %v2737 = vmax.f32 %v2711, 0.0
    %v2738 = vmax.f32 %v2712, 0.0
    %v2739 = vmax.f32 %v2713, 0.0
    %v2740 = vmax.f32 %v2714, 0.0
    %v2741 = vmax.f32 %v2715, 0.0
    %v2742 = vmax.f32 %v2716, 0.0
    %v2743 = vmax.f32 %v2717, 0.0
    %vm2744 = vcmask 130048
    %2745 = vst.msk [vmem:[#allocation4] sm:$0xff] %vm2744, %v2718
    %2746 = vst.msk [vmem:[#allocation4 + $0x8] sm:$0xff] %vm2744, %v2719
    %2747 = vst.msk [vmem:[#allocation4 + $0x10] sm:$0xff] %vm2744, %v2720
    %2748 = vst.msk [vmem:[#allocation4 + $0x18] sm:$0xff] %vm2744, %v2721
    %2749 = vst.msk [vmem:[#allocation4 + $0x20] sm:$0xff] %vm2744, %v2722
    %2750 = vst.msk [vmem:[#allocation4 + $0x28] sm:$0xff] %vm2744, %v2723
    %2751 = vst.msk [vmem:[#allocation4 + $0x30] sm:$0xff] %vm2744, %v2724
    %2752 = vst.msk [vmem:[#allocation4 + $0x38] sm:$0xff] %vm2744, %v2725
    %2753 = vst.msk [vmem:[#allocation4 + $0x40] sm:$0xff] %vm2744, %v2726
    %2754 = vst.msk [vmem:[#allocation4 + $0x48] sm:$0xff] %vm2744, %v2727
    %2755 = vst.msk [vmem:[#allocation4 + $0x50] sm:$0xff] %vm2744, %v2728
    %2756 = vst.msk [vmem:[#allocation4 + $0x58] sm:$0xff] %vm2744, %v2729
    %2757 = vst.msk [vmem:[#allocation4 + $0x60] sm:$0xff] %vm2744, %v2730
    %2758 = vst.msk [vmem:[#allocation4 + $0x68] sm:$0xff] %vm2744, %v2731
    %2759 = vst.msk [vmem:[#allocation4 + $0x70] sm:$0xff] %vm2744, %v2732
    %2760 = vst.msk [vmem:[#allocation4 + $0x78] sm:$0xff] %vm2744, %v2733
    %2761 = vst.msk [vmem:[#allocation4 + $0x80] sm:$0xff] %vm2744, %v2734
    %2762 = vst.msk [vmem:[#allocation4 + $0x88] sm:$0xff] %vm2744, %v2735
    %2763 = vst.msk [vmem:[#allocation4 + $0x90] sm:$0xff] %vm2744, %v2736
    %2764 = vst.msk [vmem:[#allocation4 + $0x98] sm:$0xff] %vm2744, %v2737
    %2765 = vst.msk [vmem:[#allocation4 + $0xa0] sm:$0xff] %vm2744, %v2738
    %2766 = vst.msk [vmem:[#allocation4 + $0xa8] sm:$0xff] %vm2744, %v2739
    %2767 = vst.msk [vmem:[#allocation4 + $0xb0] sm:$0xff] %vm2744, %v2740
    %2768 = vst.msk [vmem:[#allocation4 + $0xb8] sm:$0xff] %vm2744, %v2741
    %2769 = vst.msk [vmem:[#allocation4 + $0xc0] sm:$0xff] %vm2744, %v2742
    %2770 = vst.msk [vmem:[#allocation4 + $0xc8] sm:$0xff] %vm2744, %v2743
    // Predicated region
    $region48: #{tpu_custom_call.1} parent=1 // pred_check
      _
    $region49: #{tpu_custom_call.1} parent=1 // pred_check_branch
      %2772 = sbr.rel (0) target = $region51
    $region50: #{tpu_custom_call.1} parent=1 // pred_region
      // Predicated region
      $region52: #{tpu_custom_call.1} parent=50 // pred_check
        _
      $region53: #{tpu_custom_call.1} parent=50 // pred_check_branch
        %2774 = sbr.rel (0) target = $region55
      $region54: #{tpu_custom_call.1} parent=50 // pred_region
        // Predicated region
        $region56: #{tpu_custom_call.1} parent=54 // pred_check
          _
        $region57: #{tpu_custom_call.1} parent=54 // pred_check_branch
          %2776 = sbr.rel (0) target = $region59
        $region58: #{tpu_custom_call.1} parent=54 // pred_region
          // Predicated region
          $region71: #{tpu_custom_call.1} parent=58 // pred_check
            _
          $region72: #{tpu_custom_call.1} parent=58 // pred_check_branch
            %2840 = sbr.rel (0) target = $region74
          $region73: #{tpu_custom_call.1} parent=58 // pred_region
            loop: start=0, step=1, limit=1
            $region75: #{tpu_custom_call.1} parent=73 // loop_pre_header
              _
            $region76: #{tpu_custom_call.1} parent=73 // loop_header
              %s2842 = sphi 0, %s2846
              %p2843 = scmp.ge.s32.totalorder %s2842, 1
              %s2847 = sphi [#allocation4], [#allocation4]
              %s2848 = sphi %s3, %s3
            $region77: #{tpu_custom_call.1} parent=73 // loop_header_branch
              %2845 = sbr.rel (%p2843) target = $region81
            $region78: #{tpu_custom_call.1} parent=73 // loop_body
              %v2849 = vld [vmem:[%s2847] sm:$0xff]
              %2850 = vst [vmem:[%s2848] sm:$0xff] %v2849
              %v2851 = vld [vmem:[%s2847 + $0x8] sm:$0xff]
              %2852 = vst [vmem:[%s2848 + $0x8] sm:$0xff] %v2851
              %v2853 = vld [vmem:[%s2847 + $0x10] sm:$0xff]
              %2854 = vst [vmem:[%s2848 + $0x10] sm:$0xff] %v2853
              %v2855 = vld [vmem:[%s2847 + $0x18] sm:$0xff]
              %2856 = vst [vmem:[%s2848 + $0x18] sm:$0xff] %v2855
              %v2857 = vld [vmem:[%s2847 + $0x20] sm:$0xff]
              %2858 = vst [vmem:[%s2848 + $0x20] sm:$0xff] %v2857
              %v2859 = vld [vmem:[%s2847 + $0x28] sm:$0xff]
              %2860 = vst [vmem:[%s2848 + $0x28] sm:$0xff] %v2859
              %v2861 = vld [vmem:[%s2847 + $0x30] sm:$0xff]
              %2862 = vst [vmem:[%s2848 + $0x30] sm:$0xff] %v2861
              %v2863 = vld [vmem:[%s2847 + $0x38] sm:$0xff]
              %2864 = vst [vmem:[%s2848 + $0x38] sm:$0xff] %v2863
              %v2865 = vld [vmem:[%s2847 + $0x40] sm:$0xff]
              %2866 = vst [vmem:[%s2848 + $0x40] sm:$0xff] %v2865
              %v2867 = vld [vmem:[%s2847 + $0x48] sm:$0xff]
              %2868 = vst [vmem:[%s2848 + $0x48] sm:$0xff] %v2867
              %v2869 = vld [vmem:[%s2847 + $0x50] sm:$0xff]
              %2870 = vst [vmem:[%s2848 + $0x50] sm:$0xff] %v2869
              %v2871 = vld [vmem:[%s2847 + $0x58] sm:$0xff]
              %2872 = vst [vmem:[%s2848 + $0x58] sm:$0xff] %v2871
              %v2873 = vld [vmem:[%s2847 + $0x60] sm:$0xff]
              %2874 = vst [vmem:[%s2848 + $0x60] sm:$0xff] %v2873
              %v2875 = vld [vmem:[%s2847 + $0x68] sm:$0xff]
              %2876 = vst [vmem:[%s2848 + $0x68] sm:$0xff] %v2875
              %v2877 = vld [vmem:[%s2847 + $0x70] sm:$0xff]
              %2878 = vst [vmem:[%s2848 + $0x70] sm:$0xff] %v2877
              %v2879 = vld [vmem:[%s2847 + $0x78] sm:$0xff]
              %2880 = vst [vmem:[%s2848 + $0x78] sm:$0xff] %v2879
              %v2881 = vld [vmem:[%s2847 + $0x80] sm:$0xff]
              %2882 = vst [vmem:[%s2848 + $0x80] sm:$0xff] %v2881
              %v2883 = vld [vmem:[%s2847 + $0x88] sm:$0xff]
              %2884 = vst [vmem:[%s2848 + $0x88] sm:$0xff] %v2883
              %v2885 = vld [vmem:[%s2847 + $0x90] sm:$0xff]
              %2886 = vst [vmem:[%s2848 + $0x90] sm:$0xff] %v2885
              %v2887 = vld [vmem:[%s2847 + $0x98] sm:$0xff]
              %2888 = vst [vmem:[%s2848 + $0x98] sm:$0xff] %v2887
              %v2889 = vld [vmem:[%s2847 + $0xa0] sm:$0xff]
              %2890 = vst [vmem:[%s2848 + $0xa0] sm:$0xff] %v2889
              %v2891 = vld [vmem:[%s2847 + $0xa8] sm:$0xff]
              %2892 = vst [vmem:[%s2848 + $0xa8] sm:$0xff] %v2891
              %v2893 = vld [vmem:[%s2847 + $0xb0] sm:$0xff]
              %2894 = vst [vmem:[%s2848 + $0xb0] sm:$0xff] %v2893
              %v2895 = vld [vmem:[%s2847 + $0xb8] sm:$0xff]
              %2896 = vst [vmem:[%s2848 + $0xb8] sm:$0xff] %v2895
              %v2897 = vld [vmem:[%s2847 + $0xc0] sm:$0xff]
              %2898 = vst [vmem:[%s2848 + $0xc0] sm:$0xff] %v2897
            $region79: #{tpu_custom_call.1} parent=73 // loop_footer
              %s2846 = sadd.s32 1, %s2842
            $region80: #{tpu_custom_call.1} parent=73 // loop_footer_branch
              %2841 = sbr.rel target = $region76
            $region81: #{tpu_custom_call.1} parent=73 // loop_exit
              _
          $region74: #{tpu_custom_call.1} parent=58 // pred_fallthru
            _
          // Predicated region
          $region82: #{tpu_custom_call.1} parent=58 // pred_check
            _
          $region83: #{tpu_custom_call.1} parent=58 // pred_check_branch
            %2900 = sbr.rel target = $region85
          $region84: #{tpu_custom_call.1} parent=58 // pred_region
            _
          $region85: #{tpu_custom_call.1} parent=58 // pred_fallthru
            _
        $region59: #{tpu_custom_call.1} parent=54 // pred_fallthru
          _
        // Predicated region
        $region60: #{tpu_custom_call.1} parent=54 // pred_check
          _
        $region61: #{tpu_custom_call.1} parent=54 // pred_check_branch
          %2778 = sbr.rel target = $region63
        $region62: #{tpu_custom_call.1} parent=54 // pred_region
          %s2780 = ssub.s32 256, 1
          loop: start=0, step=1, limit=1
          $region64: #{tpu_custom_call.1} parent=62 // loop_pre_header
            _
          $region65: #{tpu_custom_call.1} parent=62 // loop_header
            %s2782 = sphi 0, %s2786
            %p2783 = scmp.ge.s32.totalorder %s2782, 1
            %s2787 = sphi [#allocation4], [#allocation4]
            %s2788 = sphi %s3, %s3
          $region66: #{tpu_custom_call.1} parent=62 // loop_header_branch
            %2785 = sbr.rel (%p2783) target = $region70
          $region67: #{tpu_custom_call.1} parent=62 // loop_body
            %v2789 = vld [vmem:[%s2787] sm:%s2780]
            %2790 = vst [vmem:[%s2788] sm:%s2780] %v2789
            %v2791 = vld [vmem:[%s2787 + $0x8] sm:%s2780]
            %2792 = vst [vmem:[%s2788 + $0x8] sm:%s2780] %v2791
            %v2793 = vld [vmem:[%s2787 + $0x10] sm:%s2780]
            %2794 = vst [vmem:[%s2788 + $0x10] sm:%s2780] %v2793
            %v2795 = vld [vmem:[%s2787 + $0x18] sm:%s2780]
            %2796 = vst [vmem:[%s2788 + $0x18] sm:%s2780] %v2795
            %v2797 = vld [vmem:[%s2787 + $0x20] sm:%s2780]
            %2798 = vst [vmem:[%s2788 + $0x20] sm:%s2780] %v2797
            %v2799 = vld [vmem:[%s2787 + $0x28] sm:%s2780]
            %2800 = vst [vmem:[%s2788 + $0x28] sm:%s2780] %v2799
            %v2801 = vld [vmem:[%s2787 + $0x30] sm:%s2780]
            %2802 = vst [vmem:[%s2788 + $0x30] sm:%s2780] %v2801
            %v2803 = vld [vmem:[%s2787 + $0x38] sm:%s2780]
            %2804 = vst [vmem:[%s2788 + $0x38] sm:%s2780] %v2803
            %v2805 = vld [vmem:[%s2787 + $0x40] sm:%s2780]
            %2806 = vst [vmem:[%s2788 + $0x40] sm:%s2780] %v2805
            %v2807 = vld [vmem:[%s2787 + $0x48] sm:%s2780]
            %2808 = vst [vmem:[%s2788 + $0x48] sm:%s2780] %v2807
            %v2809 = vld [vmem:[%s2787 + $0x50] sm:%s2780]
            %2810 = vst [vmem:[%s2788 + $0x50] sm:%s2780] %v2809
            %v2811 = vld [vmem:[%s2787 + $0x58] sm:%s2780]
            %2812 = vst [vmem:[%s2788 + $0x58] sm:%s2780] %v2811
            %v2813 = vld [vmem:[%s2787 + $0x60] sm:%s2780]
            %2814 = vst [vmem:[%s2788 + $0x60] sm:%s2780] %v2813
            %v2815 = vld [vmem:[%s2787 + $0x68] sm:%s2780]
            %2816 = vst [vmem:[%s2788 + $0x68] sm:%s2780] %v2815
            %v2817 = vld [vmem:[%s2787 + $0x70] sm:%s2780]
            %2818 = vst [vmem:[%s2788 + $0x70] sm:%s2780] %v2817
            %v2819 = vld [vmem:[%s2787 + $0x78] sm:%s2780]
            %2820 = vst [vmem:[%s2788 + $0x78] sm:%s2780] %v2819
            %v2821 = vld [vmem:[%s2787 + $0x80] sm:%s2780]
            %2822 = vst [vmem:[%s2788 + $0x80] sm:%s2780] %v2821
            %v2823 = vld [vmem:[%s2787 + $0x88] sm:%s2780]
            %2824 = vst [vmem:[%s2788 + $0x88] sm:%s2780] %v2823
            %v2825 = vld [vmem:[%s2787 + $0x90] sm:%s2780]
            %2826 = vst [vmem:[%s2788 + $0x90] sm:%s2780] %v2825
            %v2827 = vld [vmem:[%s2787 + $0x98] sm:%s2780]
            %2828 = vst [vmem:[%s2788 + $0x98] sm:%s2780] %v2827
            %v2829 = vld [vmem:[%s2787 + $0xa0] sm:%s2780]
            %2830 = vst [vmem:[%s2788 + $0xa0] sm:%s2780] %v2829
            %v2831 = vld [vmem:[%s2787 + $0xa8] sm:%s2780]
            %2832 = vst [vmem:[%s2788 + $0xa8] sm:%s2780] %v2831
            %v2833 = vld [vmem:[%s2787 + $0xb0] sm:%s2780]
            %2834 = vst [vmem:[%s2788 + $0xb0] sm:%s2780] %v2833
            %v2835 = vld [vmem:[%s2787 + $0xb8] sm:%s2780]
            %2836 = vst [vmem:[%s2788 + $0xb8] sm:%s2780] %v2835
            %v2837 = vld [vmem:[%s2787 + $0xc0] sm:%s2780]
            %2838 = vst [vmem:[%s2788 + $0xc0] sm:%s2780] %v2837
          $region68: #{tpu_custom_call.1} parent=62 // loop_footer
            %s2786 = sadd.s32 1, %s2782
          $region69: #{tpu_custom_call.1} parent=62 // loop_footer_branch
            %2781 = sbr.rel target = $region65
          $region70: #{tpu_custom_call.1} parent=62 // loop_exit
            _
        $region63: #{tpu_custom_call.1} parent=54 // pred_fallthru
          _
      $region55: #{tpu_custom_call.1} parent=50 // pred_fallthru
        _
      %2901 = vnop
    $region51: #{tpu_custom_call.1} parent=1 // pred_fallthru
      _
    // Predicated region
    $region86: #{tpu_custom_call.1} parent=1 // pred_check
      _
    $region87: #{tpu_custom_call.1} parent=1 // pred_check_branch
      %2903 = sbr.rel (0) target = $region89
    $region88: #{tpu_custom_call.1} parent=1 // pred_region
      _
    $region89: #{tpu_custom_call.1} parent=1 // pred_fallthru
      _
  %2904 = vsyncmov [#allocation3]
  %s2905 = vpop.sfrf %2904
  %p2906 = scmp.eq.s32.totalorder %s2905, 0
  %p2907 = pneg %p2906
  %2909 = shalt.err (%p2907)

</llo_original>
